<compile_context>
chip_gen: v6e
topology: v6e:2x2x1
jax: 0.10.0
libtpu: 0.0.40
codegen_flags: <defaults>
</compile_context>

<pallas_src>
import jax
import jax.numpy as jnp
from jax import lax
from jax.experimental import pallas as pl
from jax.experimental.pallas import tpu as pltpu

# ---- small shapes consistent with the module ------------------------------
B, T, C, H, W = 2, 4, 32, 16, 16      # backbone_dim = node_dim = out_num_ch = 32, H = W = 16
HW = H * W
N_NODES = 9                            # 3x3 region grid (DyReg default)
N_PAD = 16                             # zero-padded node count (TPU-friendly tiles)
D_LSTM = 32                            # dyregParams.offset_lstm_dim
C_OUT = 32                             # out_num_ch
N_CLASSES = 10


# ===========================================================================
# Fused Pallas kernel: per-batch-element dynamic-graph update + head
#   region pooling (batched over T) -> GNN MLP chain on (T*N_PAD, C)
#   -> fused head: mean over (W,H,T) of (x + dx) -> fc(32, 10)
# ===========================================================================
def fused_dyreg_head_kernel(x_ref, a_ref, w1_ref, b1_ref, adjbd_ref, w2_ref,
                            b2_ref, wp_ref, wfc_ref, bfc_ref, out_ref):
    # x block: (1, T, C, HW) -> (T, HW, C).  The minor-dim transpose is done
    # in VMEM on the XLU (idle anyway), replacing an XLA HBM transpose pass.
    xf = jnp.swapaxes(x_ref[0], 1, 2)                       # (T, HW, C)
    A = a_ref[0]                                            # (T, N_PAD, HW)

    # (1) region-attention pooling, batched over the T frames of this element
    nodes = jnp.einsum('tnh,thc->tnc', A, xf,
                       preferred_element_type=jnp.float32)  # (T, N_PAD, C)
    nodes2 = nodes.reshape(T * N_PAD, C)                    # (64, 32)

    # (2) GNN: node MLP -> message passing (block-diag adjacency over frames)
    #     -> update MLP -> output projection
    h = jnp.maximum(
        jnp.dot(nodes2, w1_ref[...], preferred_element_type=jnp.float32)
        + b1_ref[...], 0.0)                                 # (64, 32)
    agg = jnp.dot(adjbd_ref[...], h, preferred_element_type=jnp.float32)
    upd = jnp.maximum(
        jnp.dot(agg, w2_ref[...], preferred_element_type=jnp.float32)
        + b2_ref[...], 0.0)
    proj = jnp.dot(upd, wp_ref[...], preferred_element_type=jnp.float32)  # (64, C_OUT)

    # (3) fused head.  dx = A^T @ proj per frame, so
    #     sum_{t,hw} dx[t,hw,c] == sum_{t,n} (sum_hw A[t,n,hw]) * proj[t,n,c]
    #     (exact linear-algebra identity; padded nodes have zero row-sum so
    #      they drop out, preserving the original zero-padding cancellation).
    a_rowsum = jnp.sum(A.reshape(T * N_PAD, HW), axis=-1, keepdims=True)  # (64, 1)
    dx_sum = jnp.sum(a_rowsum * proj, axis=0, keepdims=True)              # (1, C_OUT)
    x_sum = jnp.sum(xf.reshape(T * HW, C), axis=0, keepdims=True)         # (1, C)
    pooled = (x_sum + dx_sum) * (1.0 / (T * HW))                          # mean over W,H,T

    out_ref[0] = (jnp.dot(pooled, wfc_ref[...],
                          preferred_element_type=jnp.float32)
                  + bfc_ref[...])                                         # (1, 10)


def fused_dyreg_head(x_cm, att, adj_bd, p):
    """x_cm: (B, T, C, HW), att: (B, T, N_PAD, HW) -> logits (B, 1, N_CLASSES)."""
    return pl.pallas_call(
        fused_dyreg_head_kernel,
        out_shape=jax.ShapeDtypeStruct((B, 1, N_CLASSES), jnp.float32),
        grid=(B,),
        in_specs=[
            pl.BlockSpec((1, T, C, HW), lambda b: (b, 0, 0, 0)),
            pl.BlockSpec((1, T, N_PAD, HW), lambda b: (b, 0, 0, 0)),
            pl.BlockSpec((C, C), lambda b: (0, 0)),
            pl.BlockSpec((1, C), lambda b: (0, 0)),
            pl.BlockSpec((T * N_PAD, T * N_PAD), lambda b: (0, 0)),
            pl.BlockSpec((C, C), lambda b: (0, 0)),
            pl.BlockSpec((1, C), lambda b: (0, 0)),
            pl.BlockSpec((C, C_OUT), lambda b: (0, 0)),
            pl.BlockSpec((C_OUT, N_CLASSES), lambda b: (0, 0)),
            pl.BlockSpec((1, N_CLASSES), lambda b: (0, 0)),
        ],
        out_specs=pl.BlockSpec((1, 1, N_CLASSES), lambda b: (b, 0, 0)),
        compiler_params=pltpu.CompilerParams(dimension_semantics=("parallel",)),
    )(x_cm, att, p['w1'], p['b1'], adj_bd, p['w2'], p['b2'], p['wp'],
      p['w_fc'], p['b_fc'])


# ===========================================================================
# Plain-JAX glue: LSTM offset predictor + Gaussian region attention maps
# ===========================================================================
def lstm_region_params(pooled, p):
    """pooled: (B, T, C) -> per-frame per-node region params (B, T, N, 4)."""
    def step(carry, x_t):
        h, c = carry
        gates = x_t @ p['w_ih'] + h @ p['w_hh'] + p['b_lstm']
        i, f, g, o = jnp.split(gates, 4, axis=-1)
        i, f, o = jax.nn.sigmoid(i), jax.nn.sigmoid(f), jax.nn.sigmoid(o)
        g = jnp.tanh(g)
        c = f * c + i * g
        h = o * jnp.tanh(c)
        return (h, c), h

    h0 = jnp.zeros((B, D_LSTM), jnp.float32)
    (_, _), hs = lax.scan(step, (h0, h0), jnp.swapaxes(pooled, 0, 1))
    hs = jnp.swapaxes(hs, 0, 1)                                   # (B, T, D)
    reg = hs @ p['w_reg'] + p['b_reg']                            # (B, T, N*4)
    return reg.reshape(B, T, N_NODES, 4)


def region_attention_maps(reg):
    """reg: (B, T, N, 4) -> softmax region maps (B, T, N_PAD, HW)."""
    gy = (jnp.arange(H, dtype=jnp.float32) + 0.5) / H
    gx = (jnp.arange(W, dtype=jnp.float32) + 0.5) / W
    anc = (jnp.arange(3, dtype=jnp.float32) + 0.5) / 3.0          # 3x3 anchors
    cy0, cx0 = jnp.repeat(anc, 3), jnp.tile(anc, 3)               # (9,), (9,)

    dcx, dcy, lsx, lsy = (reg[..., 0], reg[..., 1], reg[..., 2], reg[..., 3])
    cx = cx0 + 0.1 * jnp.tanh(dcx)
    cy = cy0 + 0.1 * jnp.tanh(dcy)
    sx = 0.05 + 0.15 * jax.nn.softplus(lsx + 1.0)
    sy = 0.05 + 0.15 * jax.nn.softplus(lsy + 1.0)

    dy2 = (gy[None, None, None, :, None] - cy[..., None, None]) ** 2 / (2.0 * sy[..., None, None] ** 2)
    dx2 = (gx[None, None, None, None, :] - cx[..., None, None]) ** 2 / (2.0 * sx[..., None, None] ** 2)
    logit = -(dy2 + dx2)                                          # (B, T, N, H, W)
    att = jax.nn.softmax(logit.reshape(B, T, N_NODES, HW), axis=-1)
    att = jnp.pad(att, ((0, 0), (0, 0), (0, N_PAD - N_NODES), (0, 0)))
    return att                                                    # (B, T, N_PAD, HW)


# ===========================================================================
# Parameters (deterministic, in-script)
# ===========================================================================
def init_params(key):
    ks = jax.random.split(key, 10)

    def lin(k, shape, scale=None):
        s = scale if scale is not None else 1.0 / jnp.sqrt(shape[0])
        return (s * jax.random.normal(k, shape)).astype(jnp.float32)

    adj = jax.random.uniform(ks[4], (N_NODES, N_NODES), jnp.float32) / N_NODES
    adj = jnp.pad(adj, ((0, N_PAD - N_NODES), (0, N_PAD - N_NODES)))
    return {
        'w_ih': lin(ks[0], (C, 4 * D_LSTM)),
        'w_hh': lin(ks[1], (D_LSTM, 4 * D_LSTM)),
        'b_lstm': jnp.zeros((4 * D_LSTM,), jnp.float32),
        'w_reg': lin(ks[2], (D_LSTM, N_NODES * 4), 0.1),
        'b_reg': jnp.zeros((N_NODES * 4,), jnp.float32),
        'w1': lin(ks[3], (C, C)),
        'b1': jnp.zeros((1, C), jnp.float32),
        'adj': adj,
        'w2': lin(ks[5], (C, C)),
        'b2': jnp.zeros((1, C), jnp.float32),
        'wp': lin(ks[6], (C, C_OUT)),
        'w_fc': lin(ks[7], (C_OUT, N_CLASSES)),
        'b_fc': jnp.zeros((1, N_CLASSES), jnp.float32),
    }


# ===========================================================================
# Full forward
# ===========================================================================
@jax.jit
def space_time_model(x, p):
    # --- offset LSTM + Gaussian region maps (plain-JAX glue) ---
    pooled = jnp.mean(x, axis=(3, 4))                              # (B, T, C)
    reg = lstm_region_params(pooled, p)                            # (B, T, N, 4)
    att = region_attention_maps(reg)                               # (B, T, N_PAD, HW)

    # --- single fused Pallas kernel: graph update + (x+dx) pooling + fc ---
    x_cm = x.reshape(B, T, C, HW)                                  # free reshape (channel-major)
    adj_bd = jnp.kron(jnp.eye(T, dtype=jnp.float32), p['adj'])     # (T*N_PAD, T*N_PAD)
    out = fused_dyreg_head(x_cm, att, adj_bd, p)                   # (B, 1, 10)
    return out.reshape(B, N_CLASSES)


# pure-JAX reference of the same synthesized model (for a correctness check)
def reference_model(x, p):
    pooled = jnp.mean(x, axis=(3, 4))
    reg = lstm_region_params(pooled, p)
    att = region_attention_maps(reg).reshape(B * T, N_PAD, HW)
    x_flat = x.transpose(0, 1, 3, 4, 2).reshape(B * T, HW, C)
    nodes = jnp.einsum('bnh,bhc->bnc', att, x_flat)
    h = jax.nn.relu(nodes @ p['w1'] + p['b1'])
    agg = jnp.einsum('nm,bmc->bnc', p['adj'], h)
    upd = jax.nn.relu(agg @ p['w2'] + p['b2'])
    proj = upd @ p['wp']
    dx_flat = jnp.einsum('bnh,bnc->bhc', att, proj)
    dx = dx_flat.reshape(B, T, H, W, C_OUT).transpose(0, 1, 4, 2, 3)
    s = x + dx
    s = s.mean(-1).mean(-1).mean(-2)                               # (B, C)
    return s @ p['w_fc'] + p['b_fc']


if __name__ == "__main__":
    key = jax.random.PRNGKey(0)
    kx, kp = jax.random.split(key)
    x = jax.random.normal(kx, (B, T, C, H, W), jnp.float32)
    params = init_params(kp)

    out = space_time_model(x, params)
    out = jax.block_until_ready(out)
    assert out.shape == (B, N_CLASSES), out.shape

    ref = reference_model(x, params)
    assert jnp.allclose(out, ref, rtol=1e-4, atol=1e-4), (out, ref)

    print("KERNEL_OK")
</pallas_src>

<mosaic_0001>
module attributes {stable_mosaic.version = 11 : i64} {
  func.func @fused_dyreg_head_kernel(%arg0: i32, %arg1: memref<1x4x32x256xf32, #tpu.memory_space<vmem>>, %arg2: memref<1x4x16x256xf32, #tpu.memory_space<vmem>>, %arg3: memref<32x32xf32, #tpu.memory_space<vmem>>, %arg4: memref<1x32xf32, #tpu.memory_space<vmem>>, %arg5: memref<64x64xf32, #tpu.memory_space<vmem>>, %arg6: memref<32x32xf32, #tpu.memory_space<vmem>>, %arg7: memref<1x32xf32, #tpu.memory_space<vmem>>, %arg8: memref<32x32xf32, #tpu.memory_space<vmem>>, %arg9: memref<32x10xf32, #tpu.memory_space<vmem>>, %arg10: memref<1x10xf32, #tpu.memory_space<vmem>>, %arg11: memref<1x1x10xf32, #tpu.memory_space<vmem>>) attributes {dimension_semantics = [#tpu.dimension_semantics<parallel>], iteration_bounds = array<i64: 2>, scalar_prefetch = 0 : i64, scratch_operands = 0 : i64, tpu.core_type = #tpu.core_type<tc>, window_params = [{transform_indices = @transform_0, window_bounds = array<i64: 1, 4, 32, 256>}, {transform_indices = @transform_1, window_bounds = array<i64: 1, 4, 16, 256>}, {pipeline_mode = #tpu.pipeline_mode<synchronous>, transform_indices = @transform_2, window_bounds = array<i64: 32, 32>}, {pipeline_mode = #tpu.pipeline_mode<synchronous>, transform_indices = @transform_3, window_bounds = array<i64: 1, 32>}, {pipeline_mode = #tpu.pipeline_mode<synchronous>, transform_indices = @transform_4, window_bounds = array<i64: 64, 64>}, {pipeline_mode = #tpu.pipeline_mode<synchronous>, transform_indices = @transform_5, window_bounds = array<i64: 32, 32>}, {pipeline_mode = #tpu.pipeline_mode<synchronous>, transform_indices = @transform_6, window_bounds = array<i64: 1, 32>}, {pipeline_mode = #tpu.pipeline_mode<synchronous>, transform_indices = @transform_7, window_bounds = array<i64: 32, 32>}, {pipeline_mode = #tpu.pipeline_mode<synchronous>, transform_indices = @transform_8, window_bounds = array<i64: 32, 10>}, {pipeline_mode = #tpu.pipeline_mode<synchronous>, transform_indices = @transform_9, window_bounds = array<i64: 1, 10>}, {transform_indices = @transform_10, window_bounds = array<i64: 1, 1, 10>}]} {
    %c0 = arith.constant 0 : index
    %c0_0 = arith.constant 0 : index
    %c0_1 = arith.constant 0 : index
    %c0_2 = arith.constant 0 : index
    %0 = vector.load %arg1[%c0, %c0_0, %c0_1, %c0_2] : memref<1x4x32x256xf32, #tpu.memory_space<vmem>>, vector<1x4x32x256xf32>
    %1 = vector.shape_cast %0 : vector<1x4x32x256xf32> to vector<4x32x256xf32>
    %2 = tpu.transpose %1, [0, 2, 1] : vector<4x32x256xf32> -> vector<4x256x32xf32>
    %c0_3 = arith.constant 0 : index
    %c0_4 = arith.constant 0 : index
    %c0_5 = arith.constant 0 : index
    %c0_6 = arith.constant 0 : index
    %3 = vector.load %arg2[%c0_3, %c0_4, %c0_5, %c0_6] : memref<1x4x16x256xf32, #tpu.memory_space<vmem>>, vector<1x4x16x256xf32>
    %4 = vector.shape_cast %3 : vector<1x4x16x256xf32> to vector<4x16x256xf32>
    "tpu.trace_start"() <{level = 10 : i32, message = "tnh,thc->tnc"}> : () -> ()
    %cst = arith.constant dense<0.000000e+00> : vector<4x16x32xf32>
    %5 = tpu.matmul %4, %2, %cst {dimension_numbers = #tpu.dot_dimension_numbers<[2], [1], [1], [2], [0, 0, 0, 1, 1, 2], [0], [0]>} : vector<4x16x256xf32>, vector<4x256x32xf32>, vector<4x16x32xf32> -> vector<4x16x32xf32>
    "tpu.trace_stop"() : () -> ()
    %6 = vector.shape_cast %5 : vector<4x16x32xf32> to vector<64x32xf32>
    %c0_7 = arith.constant 0 : index
    %c0_8 = arith.constant 0 : index
    %7 = vector.load %arg3[%c0_7, %c0_8] : memref<32x32xf32, #tpu.memory_space<vmem>>, vector<32x32xf32>
    %cst_9 = arith.constant dense<0.000000e+00> : vector<64x32xf32>
    %8 = tpu.matmul %6, %7, %cst_9 {dimension_numbers = #tpu.dot_dimension_numbers<[1], [0], [0], [1], [0, 0, 1, 1], [], []>} : vector<64x32xf32>, vector<32x32xf32>, vector<64x32xf32> -> vector<64x32xf32>
    %c0_10 = arith.constant 0 : index
    %c0_11 = arith.constant 0 : index
    %9 = vector.load %arg4[%c0_10, %c0_11] : memref<1x32xf32, #tpu.memory_space<vmem>>, vector<1x32xf32>
    %10 = vector.broadcast %9 : vector<1x32xf32> to vector<64x32xf32>
    %11 = arith.addf %8, %10 : vector<64x32xf32>
    %cst_12 = arith.constant 0.000000e+00 : f32
    %12 = vector.broadcast %cst_12 : f32 to vector<64x32xf32>
    %13 = arith.maximumf %11, %12 : vector<64x32xf32>
    %c0_13 = arith.constant 0 : index
    %c0_14 = arith.constant 0 : index
    %14 = vector.load %arg5[%c0_13, %c0_14] : memref<64x64xf32, #tpu.memory_space<vmem>>, vector<64x64xf32>
    %cst_15 = arith.constant dense<0.000000e+00> : vector<64x32xf32>
    %15 = tpu.matmul %14, %13, %cst_15 {dimension_numbers = #tpu.dot_dimension_numbers<[1], [0], [0], [1], [0, 0, 1, 1], [], []>} : vector<64x64xf32>, vector<64x32xf32>, vector<64x32xf32> -> vector<64x32xf32>
    %c0_16 = arith.constant 0 : index
    %c0_17 = arith.constant 0 : index
    %16 = vector.load %arg6[%c0_16, %c0_17] : memref<32x32xf32, #tpu.memory_space<vmem>>, vector<32x32xf32>
    %cst_18 = arith.constant dense<0.000000e+00> : vector<64x32xf32>
    %17 = tpu.matmul %15, %16, %cst_18 {dimension_numbers = #tpu.dot_dimension_numbers<[1], [0], [0], [1], [0, 0, 1, 1], [], []>} : vector<64x32xf32>, vector<32x32xf32>, vector<64x32xf32> -> vector<64x32xf32>
    %c0_19 = arith.constant 0 : index
    %c0_20 = arith.constant 0 : index
    %18 = vector.load %arg7[%c0_19, %c0_20] : memref<1x32xf32, #tpu.memory_space<vmem>>, vector<1x32xf32>
    %19 = vector.broadcast %18 : vector<1x32xf32> to vector<64x32xf32>
    %20 = arith.addf %17, %19 : vector<64x32xf32>
    %cst_21 = arith.constant 0.000000e+00 : f32
    %21 = vector.broadcast %cst_21 : f32 to vector<64x32xf32>
    %22 = arith.maximumf %20, %21 : vector<64x32xf32>
    %c0_22 = arith.constant 0 : index
    %c0_23 = arith.constant 0 : index
    %23 = vector.load %arg8[%c0_22, %c0_23] : memref<32x32xf32, #tpu.memory_space<vmem>>, vector<32x32xf32>
    %cst_24 = arith.constant dense<0.000000e+00> : vector<64x32xf32>
    %24 = tpu.matmul %22, %23, %cst_24 {dimension_numbers = #tpu.dot_dimension_numbers<[1], [0], [0], [1], [0, 0, 1, 1], [], []>} : vector<64x32xf32>, vector<32x32xf32>, vector<64x32xf32> -> vector<64x32xf32>
    %25 = vector.shape_cast %4 : vector<4x16x256xf32> to vector<64x256xf32>
    %cst_25 = arith.constant dense<0.000000e+00> : vector<64xf32>
    %26 = vector.multi_reduction <add>, %25, %cst_25 [1] : vector<64x256xf32> to vector<64xf32>
    %27 = vector.shape_cast %26 : vector<64xf32> to vector<64x1xf32>
    %28 = vector.broadcast %27 : vector<64x1xf32> to vector<64x32xf32>
    %29 = arith.mulf %28, %24 : vector<64x32xf32>
    %cst_26 = arith.constant dense<0.000000e+00> : vector<32xf32>
    %30 = vector.multi_reduction <add>, %29, %cst_26 [0] : vector<64x32xf32> to vector<32xf32>
    %31 = vector.shape_cast %30 : vector<32xf32> to vector<1x32xf32>
    %32 = vector.shape_cast %2 : vector<4x256x32xf32> to vector<1024x32xf32>
    %cst_27 = arith.constant dense<0.000000e+00> : vector<32xf32>
    %33 = vector.multi_reduction <add>, %32, %cst_27 [0] : vector<1024x32xf32> to vector<32xf32>
    %34 = vector.shape_cast %33 : vector<32xf32> to vector<1x32xf32>
    %35 = arith.addf %34, %31 : vector<1x32xf32>
    %cst_28 = arith.constant 9.765625E-4 : f32
    %36 = vector.broadcast %cst_28 : f32 to vector<1x32xf32>
    %37 = arith.mulf %35, %36 : vector<1x32xf32>
    %c0_29 = arith.constant 0 : index
    %c0_30 = arith.constant 0 : index
    %38 = vector.load %arg9[%c0_29, %c0_30] : memref<32x10xf32, #tpu.memory_space<vmem>>, vector<32x10xf32>
    %cst_31 = arith.constant dense<0.000000e+00> : vector<1x10xf32>
    %39 = tpu.matmul %37, %38, %cst_31 {dimension_numbers = #tpu.dot_dimension_numbers<[1], [0], [0], [1], [0, 0, 1, 1], [], []>} : vector<1x32xf32>, vector<32x10xf32>, vector<1x10xf32> -> vector<1x10xf32>
    %c0_32 = arith.constant 0 : index
    %c0_33 = arith.constant 0 : index
    %40 = vector.load %arg10[%c0_32, %c0_33] : memref<1x10xf32, #tpu.memory_space<vmem>>, vector<1x10xf32>
    %41 = arith.addf %39, %40 : vector<1x10xf32>
    %c0_34 = arith.constant 0 : index
    %c0_35 = arith.constant 0 : index
    %c0_36 = arith.constant 0 : index
    %42 = vector.load %arg11[%c0_34, %c0_35, %c0_36] : memref<1x1x10xf32, #tpu.memory_space<vmem>>, vector<1x1x10xf32>
    %43 = vector.shape_cast %42 : vector<1x1x10xf32> to vector<1x10xf32>
    %44 = vector.shape_cast %41 : vector<1x10xf32> to vector<1x1x10xf32>
    tpu.vector_store %arg11[%c0_34, %c0_35, %c0_36], %44 {strides = array<i32>} : memref<1x1x10xf32, #tpu.memory_space<vmem>>, vector<1x1x10xf32>,
    return
  }
  func.func @transform_0(%arg0: i32) -> (i32, i32, i32, i32) {
    %c0_i32 = arith.constant 0 : i32
    %c0_i32_0 = arith.constant 0 : i32
    %c0_i32_1 = arith.constant 0 : i32
    %c0_i32_2 = arith.constant 0 : i32
    return %arg0, %c0_i32, %c0_i32_0, %c0_i32_1 : i32, i32, i32, i32
  }
  func.func @transform_1(%arg0: i32) -> (i32, i32, i32, i32) {
    %c0_i32 = arith.constant 0 : i32
    %c0_i32_0 = arith.constant 0 : i32
    %c0_i32_1 = arith.constant 0 : i32
    %c0_i32_2 = arith.constant 0 : i32
    return %arg0, %c0_i32, %c0_i32_0, %c0_i32_1 : i32, i32, i32, i32
  }
  func.func @transform_2(%arg0: i32) -> (i32, i32) {
    %c0_i32 = arith.constant 0 : i32
    %c0_i32_0 = arith.constant 0 : i32
    %c0_i32_1 = arith.constant 0 : i32
    return %c0_i32, %c0_i32_0 : i32, i32
  }
  func.func @transform_3(%arg0: i32) -> (i32, i32) {
    %c0_i32 = arith.constant 0 : i32
    %c0_i32_0 = arith.constant 0 : i32
    %c0_i32_1 = arith.constant 0 : i32
    return %c0_i32, %c0_i32_0 : i32, i32
  }
  func.func @transform_4(%arg0: i32) -> (i32, i32) {
    %c0_i32 = arith.constant 0 : i32
    %c0_i32_0 = arith.constant 0 : i32
    %c0_i32_1 = arith.constant 0 : i32
    return %c0_i32, %c0_i32_0 : i32, i32
  }
  func.func @transform_5(%arg0: i32) -> (i32, i32) {
    %c0_i32 = arith.constant 0 : i32
    %c0_i32_0 = arith.constant 0 : i32
    %c0_i32_1 = arith.constant 0 : i32
    return %c0_i32, %c0_i32_0 : i32, i32
  }
  func.func @transform_6(%arg0: i32) -> (i32, i32) {
    %c0_i32 = arith.constant 0 : i32
    %c0_i32_0 = arith.constant 0 : i32
    %c0_i32_1 = arith.constant 0 : i32
    return %c0_i32, %c0_i32_0 : i32, i32
  }
  func.func @transform_7(%arg0: i32) -> (i32, i32) {
    %c0_i32 = arith.constant 0 : i32
    %c0_i32_0 = arith.constant 0 : i32
    %c0_i32_1 = arith.constant 0 : i32
    return %c0_i32, %c0_i32_0 : i32, i32
  }
  func.func @transform_8(%arg0: i32) -> (i32, i32) {
    %c0_i32 = arith.constant 0 : i32
    %c0_i32_0 = arith.constant 0 : i32
    %c0_i32_1 = arith.constant 0 : i32
    return %c0_i32, %c0_i32_0 : i32, i32
  }
  func.func @transform_9(%arg0: i32) -> (i32, i32) {
    %c0_i32 = arith.constant 0 : i32
    %c0_i32_0 = arith.constant 0 : i32
    %c0_i32_1 = arith.constant 0 : i32
    return %c0_i32, %c0_i32_0 : i32, i32
  }
  func.func @transform_10(%arg0: i32) -> (i32, i32, i32) {
    %c0_i32 = arith.constant 0 : i32
    %c0_i32_0 = arith.constant 0 : i32
    %c0_i32_1 = arith.constant 0 : i32
    return %arg0, %c0_i32, %c0_i32_0 : i32, i32, i32
  }
}

</mosaic_0001>

<llo_original>
// kernel: custom-call.1
$region0: #{custom-call.1}
  %s0 = inlined_call_operand.vmem [shape: f32[2,32], index: 0, kind: output, shape index: {}]

// kernel: custom-call.2
$region0: #{custom-call.2}
  %s0 = inlined_call_operand.vmem [shape: bf16[4,2,32], index: 0, kind: output, shape index: {}]

// kernel: custom-call
$region0: #{custom-call}
  %s0 = inlined_call_operand.vmem [shape: bf16[2,32], index: 0, kind: output, shape index: {}]

// kernel: tile.8
$region0: #{tile.8}
  #allocation0 [shape = 's32[1]{0}', space=sflag, size = 0x4, scoped, tag = 'scoped memory for tile.8']
  %s0 = inlined_call_operand.vmem [shape: f32[3], index: 0, kind: input, shape index: {}]
  %s1 = inlined_call_operand.vmem [shape: f32[3,3], index: 1, kind: output, shape index: {}]
  // Predicated region
  $region2: #{tile.8} parent=0 // pred_check
    _
  $region3: #{tile.8} parent=0 // pred_check_branch
    %3 = sbr.rel (0) target = $region5
  $region4: #{tile.8} parent=0 // pred_region
    _
  $region5: #{tile.8} parent=0 // pred_fallthru
    _
  %v4 = vld [vmem:[%s0] ss:$0 sm:$0xff]
  %5 = vst [vmem:[%s1] sm:$0xf] %v4

// kernel: space_time_model.1
$region0: #{space_time_model.1}
  #allocation0 [shape = 'u32[]', space=smem, size = 0x4, offset = 0x4, fixed_abs, tag = 'smem constant byte address 0x4 - core index']
  #allocation1 [shape = 'u32[144,128]{1,0:T(1,128)}', space=vmem, size = 0x12000, scoped, tag = 'internal scratch']
  %s0 = inlined_call_operand.vmem [shape: f32[2,4,32,256], index: 0, kind: input, shape index: {}]
  %s1 = inlined_call_operand.vmem [shape: f32[2,4,16,256], index: 1, kind: input, shape index: {}]
  %s2 = inlined_call_operand.vmem [shape: f32[32,32], index: 2, kind: input, shape index: {}]
  %s3 = inlined_call_operand.vmem [shape: f32[1,32], index: 3, kind: input, shape index: {}]
  %s4 = inlined_call_operand.vmem [shape: f32[64,64], index: 4, kind: input, shape index: {}]
  %s5 = inlined_call_operand.vmem [shape: f32[32,32], index: 5, kind: input, shape index: {}]
  %s6 = inlined_call_operand.vmem [shape: f32[1,32], index: 6, kind: input, shape index: {}]
  %s7 = inlined_call_operand.vmem [shape: f32[32,32], index: 7, kind: input, shape index: {}]
  %s8 = inlined_call_operand.vmem [shape: f32[32,10], index: 8, kind: input, shape index: {}]
  %s9 = inlined_call_operand.vmem [shape: f32[1,10], index: 9, kind: input, shape index: {}]
  %s10 = inlined_call_operand.hbm [shape: f32[2,1,10], index: 10, kind: output, shape index: {}]
  %s11 = sld [smem:[#allocation0]]
  $region73: #{space_time_model.1} parent=0
    _
  %s13 = ssub.s32 1, %s11
  %s14 = scalar_select 0, %s13, %s11
  $region1: #{space_time_model.1} parent=0
    #allocation2 [shape = 'u8[1024]{0}', space=vmem, size = 0x400, scoped, tag = 'output window, operand 0']
    #allocation3 [shape = 's32[2]{0}', space=sflag, size = 0x8, scoped, tag = 'scoped memory for space_time_model.1']
    %15 = vsyncpa [#allocation3], 0
    %s16 = scalar_lea.sflag [#allocation3], 1
    %17 = vsyncpa %s16, 0
    loop: start=0, step=1, limit=4
    $region2: #{space_time_model.1} parent=1 // loop_pre_header
      _
    $region3: #{space_time_model.1} parent=1 // loop_header
      %s19 = sphi 0, %s23
      %p20 = scmp.ge.s32.totalorder %s19, 4
      %s29 = sphi 0, %s31
      %s32 = sphi 0, %s29
      %s33 = sphi 0, %s32
      %s49 = sphi 0, %s33
      %s55 = sphi 0, %s57
      %s58 = sphi 0, %s55
      %s59 = sphi 0, %s58
      %s75 = sphi 0, %s59
      %s79 = sphi 0, %s79
      %s81 = sphi 0, %s79
      %s82 = sphi 0, %s81
      %s96 = sphi 0, %s82
      %s100 = sphi 0, %s100
      %s102 = sphi 0, %s100
      %s103 = sphi 0, %s102
      %s117 = sphi 0, %s103
      %s121 = sphi 0, %s121
      %s123 = sphi 0, %s121
      %s124 = sphi 0, %s123
      %s138 = sphi 0, %s124
      %s142 = sphi 0, %s142
      %s144 = sphi 0, %s142
      %s145 = sphi 0, %s144
      %s159 = sphi 0, %s145
      %s163 = sphi 0, %s163
      %s165 = sphi 0, %s163
      %s166 = sphi 0, %s165
      %s180 = sphi 0, %s166
      %s184 = sphi 0, %s184
      %s186 = sphi 0, %s184
      %s187 = sphi 0, %s186
      %s201 = sphi 0, %s187
      %s205 = sphi 0, %s205
      %s207 = sphi 0, %s205
      %s208 = sphi 0, %s207
      %s222 = sphi 0, %s208
      %s226 = sphi 0, %s226
      %s228 = sphi 0, %s226
      %s229 = sphi 0, %s228
      %s243 = sphi 0, %s229
      %s249 = sphi 0, %s251
      %s252 = sphi 0, %s249
      %s253 = sphi 0, %s252
      %s269 = sphi 0, %s253
    $region4: #{space_time_model.1} parent=1 // loop_header_branch
      %22 = sbr.rel (%p20) target = $region8
    $region5: #{space_time_model.1} parent=1 // loop_body
      %s24 = ssub.s32 %s19, 1
      %s25 = ssub.s32 %s19, 2
      %s26 = sadd.s32 %s19, 1
      %s27 = ssub.s32 %s19, %s26
      %p28 = scmp.eq.s32.totalorder %s27, 0
      %s30 = sadd.s32 %s29, 1
      %s31 = scalar_select %p28, %s29, %s30
      %p34 = pneg %p28
      %p35 = scmp.eq.s32.totalorder %s19, 1
      %p36 = por %p34, %p35
      %p37 = scmp.ne.s32.totalorder %s29, %s32
      %p38 = scmp.eq.s32.totalorder %s19, 0
      %p39 = por %p37, %p38
      %p40 = scmp.ne.s32.totalorder %s29, %s32
      %p41 = scmp.eq.s32.totalorder %s24, 1
      %p42 = por %p40, %p41
      %p43 = scmp.ne.s32.totalorder %s32, %s33
      %p44 = scmp.eq.s32.totalorder %s24, 0
      %p45 = por %p43, %p44
      %p46 = scmp.ne.s32.totalorder %s32, %s33
      %p47 = scmp.eq.s32.totalorder %s25, 1
      %p48 = por %p46, %p47
      %p50 = scmp.ne.s32.totalorder %s33, %s49
      %p51 = scmp.eq.s32.totalorder %s25, 0
      %p52 = por %p50, %p51
      %s53 = ssub.s32 %s19, %s26
      %p54 = scmp.eq.s32.totalorder %s53, 0
      %s56 = sadd.s32 %s55, 1
      %s57 = scalar_select %p54, %s55, %s56
      %p60 = pneg %p54
      %p61 = scmp.eq.s32.totalorder %s19, 1
      %p62 = por %p60, %p61
      %p63 = scmp.ne.s32.totalorder %s55, %s58
      %p64 = scmp.eq.s32.totalorder %s19, 0
      %p65 = por %p63, %p64
      %p66 = scmp.ne.s32.totalorder %s55, %s58
      %p67 = scmp.eq.s32.totalorder %s24, 1
      %p68 = por %p66, %p67
      %p69 = scmp.ne.s32.totalorder %s58, %s59
      %p70 = scmp.eq.s32.totalorder %s24, 0
      %p71 = por %p69, %p70
      %p72 = scmp.ne.s32.totalorder %s58, %s59
      %p73 = scmp.eq.s32.totalorder %s25, 1
      %p74 = por %p72, %p73
      %p76 = scmp.ne.s32.totalorder %s59, %s75
      %p77 = scmp.eq.s32.totalorder %s25, 0
      %p78 = por %p76, %p77
      %s80 = sadd.s32 %s79, 1
      %p83 = scmp.eq.s32.totalorder %s19, 1
      %p84 = scmp.ne.s32.totalorder %s79, %s81
      %p85 = scmp.eq.s32.totalorder %s19, 0
      %p86 = por %p84, %p85
      %p87 = scmp.ne.s32.totalorder %s79, %s81
      %p88 = scmp.eq.s32.totalorder %s24, 1
      %p89 = por %p87, %p88
      %p90 = scmp.ne.s32.totalorder %s81, %s82
      %p91 = scmp.eq.s32.totalorder %s24, 0
      %p92 = por %p90, %p91
      %p93 = scmp.ne.s32.totalorder %s81, %s82
      %p94 = scmp.eq.s32.totalorder %s25, 1
      %p95 = por %p93, %p94
      %p97 = scmp.ne.s32.totalorder %s82, %s96
      %p98 = scmp.eq.s32.totalorder %s25, 0
      %p99 = por %p97, %p98
      %s101 = sadd.s32 %s100, 1
      %p104 = scmp.eq.s32.totalorder %s19, 1
      %p105 = scmp.ne.s32.totalorder %s100, %s102
      %p106 = scmp.eq.s32.totalorder %s19, 0
      %p107 = por %p105, %p106
      %p108 = scmp.ne.s32.totalorder %s100, %s102
      %p109 = scmp.eq.s32.totalorder %s24, 1
      %p110 = por %p108, %p109
      %p111 = scmp.ne.s32.totalorder %s102, %s103
      %p112 = scmp.eq.s32.totalorder %s24, 0
      %p113 = por %p111, %p112
      %p114 = scmp.ne.s32.totalorder %s102, %s103
      %p115 = scmp.eq.s32.totalorder %s25, 1
      %p116 = por %p114, %p115
      %p118 = scmp.ne.s32.totalorder %s103, %s117
      %p119 = scmp.eq.s32.totalorder %s25, 0
      %p120 = por %p118, %p119
      %s122 = sadd.s32 %s121, 1
      %p125 = scmp.eq.s32.totalorder %s19, 1
      %p126 = scmp.ne.s32.totalorder %s121, %s123
      %p127 = scmp.eq.s32.totalorder %s19, 0
      %p128 = por %p126, %p127
      %p129 = scmp.ne.s32.totalorder %s121, %s123
      %p130 = scmp.eq.s32.totalorder %s24, 1
      %p131 = por %p129, %p130
      %p132 = scmp.ne.s32.totalorder %s123, %s124
      %p133 = scmp.eq.s32.totalorder %s24, 0
      %p134 = por %p132, %p133
      %p135 = scmp.ne.s32.totalorder %s123, %s124
      %p136 = scmp.eq.s32.totalorder %s25, 1
      %p137 = por %p135, %p136
      %p139 = scmp.ne.s32.totalorder %s124, %s138
      %p140 = scmp.eq.s32.totalorder %s25, 0
      %p141 = por %p139, %p140
      %s143 = sadd.s32 %s142, 1
      %p146 = scmp.eq.s32.totalorder %s19, 1
      %p147 = scmp.ne.s32.totalorder %s142, %s144
      %p148 = scmp.eq.s32.totalorder %s19, 0
      %p149 = por %p147, %p148
      %p150 = scmp.ne.s32.totalorder %s142, %s144
      %p151 = scmp.eq.s32.totalorder %s24, 1
      %p152 = por %p150, %p151
      %p153 = scmp.ne.s32.totalorder %s144, %s145
      %p154 = scmp.eq.s32.totalorder %s24, 0
      %p155 = por %p153, %p154
      %p156 = scmp.ne.s32.totalorder %s144, %s145
      %p157 = scmp.eq.s32.totalorder %s25, 1
      %p158 = por %p156, %p157
      %p160 = scmp.ne.s32.totalorder %s145, %s159
      %p161 = scmp.eq.s32.totalorder %s25, 0
      %p162 = por %p160, %p161
      %s164 = sadd.s32 %s163, 1
      %p167 = scmp.eq.s32.totalorder %s19, 1
      %p168 = scmp.ne.s32.totalorder %s163, %s165
      %p169 = scmp.eq.s32.totalorder %s19, 0
      %p170 = por %p168, %p169
      %p171 = scmp.ne.s32.totalorder %s163, %s165
      %p172 = scmp.eq.s32.totalorder %s24, 1
      %p173 = por %p171, %p172
      %p174 = scmp.ne.s32.totalorder %s165, %s166
      %p175 = scmp.eq.s32.totalorder %s24, 0
      %p176 = por %p174, %p175
      %p177 = scmp.ne.s32.totalorder %s165, %s166
      %p178 = scmp.eq.s32.totalorder %s25, 1
      %p179 = por %p177, %p178
      %p181 = scmp.ne.s32.totalorder %s166, %s180
      %p182 = scmp.eq.s32.totalorder %s25, 0
      %p183 = por %p181, %p182
      %s185 = sadd.s32 %s184, 1
      %p188 = scmp.eq.s32.totalorder %s19, 1
      %p189 = scmp.ne.s32.totalorder %s184, %s186
      %p190 = scmp.eq.s32.totalorder %s19, 0
      %p191 = por %p189, %p190
      %p192 = scmp.ne.s32.totalorder %s184, %s186
      %p193 = scmp.eq.s32.totalorder %s24, 1
      %p194 = por %p192, %p193
      %p195 = scmp.ne.s32.totalorder %s186, %s187
      %p196 = scmp.eq.s32.totalorder %s24, 0
      %p197 = por %p195, %p196
      %p198 = scmp.ne.s32.totalorder %s186, %s187
      %p199 = scmp.eq.s32.totalorder %s25, 1
      %p200 = por %p198, %p199
      %p202 = scmp.ne.s32.totalorder %s187, %s201
      %p203 = scmp.eq.s32.totalorder %s25, 0
      %p204 = por %p202, %p203
      %s206 = sadd.s32 %s205, 1
      %p209 = scmp.eq.s32.totalorder %s19, 1
      %p210 = scmp.ne.s32.totalorder %s205, %s207
      %p211 = scmp.eq.s32.totalorder %s19, 0
      %p212 = por %p210, %p211
      %p213 = scmp.ne.s32.totalorder %s205, %s207
      %p214 = scmp.eq.s32.totalorder %s24, 1
      %p215 = por %p213, %p214
      %p216 = scmp.ne.s32.totalorder %s207, %s208
      %p217 = scmp.eq.s32.totalorder %s24, 0
      %p218 = por %p216, %p217
      %p219 = scmp.ne.s32.totalorder %s207, %s208
      %p220 = scmp.eq.s32.totalorder %s25, 1
      %p221 = por %p219, %p220
      %p223 = scmp.ne.s32.totalorder %s208, %s222
      %p224 = scmp.eq.s32.totalorder %s25, 0
      %p225 = por %p223, %p224
      %s227 = sadd.s32 %s226, 1
      %p230 = scmp.eq.s32.totalorder %s19, 1
      %p231 = scmp.ne.s32.totalorder %s226, %s228
      %p232 = scmp.eq.s32.totalorder %s19, 0
      %p233 = por %p231, %p232
      %p234 = scmp.ne.s32.totalorder %s226, %s228
      %p235 = scmp.eq.s32.totalorder %s24, 1
      %p236 = por %p234, %p235
      %p237 = scmp.ne.s32.totalorder %s228, %s229
      %p238 = scmp.eq.s32.totalorder %s24, 0
      %p239 = por %p237, %p238
      %p240 = scmp.ne.s32.totalorder %s228, %s229
      %p241 = scmp.eq.s32.totalorder %s25, 1
      %p242 = por %p240, %p241
      %p244 = scmp.ne.s32.totalorder %s229, %s243
      %p245 = scmp.eq.s32.totalorder %s25, 0
      %p246 = por %p244, %p245
      %s247 = ssub.s32 %s19, %s26
      %p248 = scmp.eq.s32.totalorder %s247, 0
      %s250 = sadd.s32 %s249, 1
      %s251 = scalar_select %p248, %s249, %s250
      %p254 = pneg %p248
      %p255 = scmp.eq.s32.totalorder %s19, 1
      %p256 = por %p254, %p255
      %p257 = scmp.ne.s32.totalorder %s249, %s252
      %p258 = scmp.eq.s32.totalorder %s19, 0
      %p259 = por %p257, %p258
      %p260 = scmp.ne.s32.totalorder %s249, %s252
      %p261 = scmp.eq.s32.totalorder %s24, 1
      %p262 = por %p260, %p261
      %p263 = scmp.ne.s32.totalorder %s252, %s253
      %p264 = scmp.eq.s32.totalorder %s24, 0
      %p265 = por %p263, %p264
      %p266 = scmp.ne.s32.totalorder %s252, %s253
      %p267 = scmp.eq.s32.totalorder %s25, 1
      %p268 = por %p266, %p267
      %p270 = scmp.ne.s32.totalorder %s253, %s269
      %p271 = scmp.eq.s32.totalorder %s25, 0
      %p272 = por %p270, %p271
      %p273 = scmp.le.s32.totalorder 1, %s19
      %p274 = scmp.lt.s32.totalorder %s19, 3
      %p275 = pnand %p273, %p274
      %p276 = pneg %p275
      // Predicated region
      $region9: #{space_time_model.1} parent=5 // pred_check
        _
      $region10: #{space_time_model.1} parent=5 // pred_check_branch
        %278 = sbr.rel (%p275) target = $region12
      $region11: #{space_time_model.1} parent=5 // pred_region
        %s279 = ssub.s32 %s19, 1
        // Predicated region
        $region13: #{space_time_model.1} parent=11 // pred_check
          %p280 = pneg %p92
        $region14: #{space_time_model.1} parent=11 // pred_check_branch
          %282 = sbr.rel (%p280) target = $region16
        $region15: #{space_time_model.1} parent=11 // pred_region
          _
        $region16: #{space_time_model.1} parent=11 // pred_fallthru
          _
        // Predicated region
        $region17: #{space_time_model.1} parent=11 // pred_check
          %p283 = pneg %p113
        $region18: #{space_time_model.1} parent=11 // pred_check_branch
          %285 = sbr.rel (%p283) target = $region20
        $region19: #{space_time_model.1} parent=11 // pred_region
          _
        $region20: #{space_time_model.1} parent=11 // pred_fallthru
          _
        // Predicated region
        $region21: #{space_time_model.1} parent=11 // pred_check
          %p286 = pneg %p134
        $region22: #{space_time_model.1} parent=11 // pred_check_branch
          %288 = sbr.rel (%p286) target = $region24
        $region23: #{space_time_model.1} parent=11 // pred_region
          _
        $region24: #{space_time_model.1} parent=11 // pred_fallthru
          _
        // Predicated region
        $region25: #{space_time_model.1} parent=11 // pred_check
          %p289 = pneg %p155
        $region26: #{space_time_model.1} parent=11 // pred_check_branch
          %291 = sbr.rel (%p289) target = $region28
        $region27: #{space_time_model.1} parent=11 // pred_region
          _
        $region28: #{space_time_model.1} parent=11 // pred_fallthru
          _
        // Predicated region
        $region29: #{space_time_model.1} parent=11 // pred_check
          %p292 = pneg %p176
        $region30: #{space_time_model.1} parent=11 // pred_check_branch
          %294 = sbr.rel (%p292) target = $region32
        $region31: #{space_time_model.1} parent=11 // pred_region
          _
        $region32: #{space_time_model.1} parent=11 // pred_fallthru
          _
        // Predicated region
        $region33: #{space_time_model.1} parent=11 // pred_check
          %p295 = pneg %p197
        $region34: #{space_time_model.1} parent=11 // pred_check_branch
          %297 = sbr.rel (%p295) target = $region36
        $region35: #{space_time_model.1} parent=11 // pred_region
          _
        $region36: #{space_time_model.1} parent=11 // pred_fallthru
          _
        // Predicated region
        $region37: #{space_time_model.1} parent=11 // pred_check
          %p298 = pneg %p218
        $region38: #{space_time_model.1} parent=11 // pred_check_branch
          %300 = sbr.rel (%p298) target = $region40
        $region39: #{space_time_model.1} parent=11 // pred_region
          _
        $region40: #{space_time_model.1} parent=11 // pred_fallthru
          _
        // Predicated region
        $region41: #{space_time_model.1} parent=11 // pred_check
          %p301 = pneg %p239
        $region42: #{space_time_model.1} parent=11 // pred_check_branch
          %303 = sbr.rel (%p301) target = $region44
        $region43: #{space_time_model.1} parent=11 // pred_region
          _
        $region44: #{space_time_model.1} parent=11 // pred_fallthru
          _
      $region12: #{space_time_model.1} parent=5 // pred_fallthru
        _
      %p304 = scmp.lt.s32.totalorder %s19, 2
      // Predicated region
      $region45: #{space_time_model.1} parent=5 // pred_check
        %p305 = pneg %p304
      $region46: #{space_time_model.1} parent=5 // pred_check_branch
        %307 = sbr.rel (%p305) target = $region48
      $region47: #{space_time_model.1} parent=5 // pred_region
        // Predicated region
        $region49: #{space_time_model.1} parent=47 // pred_check
          %p308 = pneg %p39
        $region50: #{space_time_model.1} parent=47 // pred_check_branch
          %310 = sbr.rel (%p308) target = $region52
        $region51: #{space_time_model.1} parent=47 // pred_region
          %p311 = scmp.lt.s32.totalorder %s19, 1
          %s312 = scalar_select %p311, %s19, 1
          %s313 = smul.addr %s312, 32
          %s314 = smul.addr %s313, 8
          %s315 = scalar_lea.vmem %s0, %s314
        $region52: #{space_time_model.1} parent=47 // pred_fallthru
          _
        // Predicated region
        $region53: #{space_time_model.1} parent=47 // pred_check
          %p316 = pneg %p65
        $region54: #{space_time_model.1} parent=47 // pred_check_branch
          %318 = sbr.rel (%p316) target = $region56
        $region55: #{space_time_model.1} parent=47 // pred_region
          %p319 = scmp.lt.s32.totalorder %s19, 1
          %s320 = scalar_select %p319, %s19, 1
          %s321 = smul.addr %s320, 16
          %s322 = smul.addr %s321, 8
          %s323 = scalar_lea.vmem %s1, %s322
        $region56: #{space_time_model.1} parent=47 // pred_fallthru
          _
      $region48: #{space_time_model.1} parent=5 // pred_fallthru
        _
      %p324 = scmp.le.s32.totalorder 1, %s19
      %p325 = scmp.lt.s32.totalorder %s19, 3
      %p326 = pnand %p324, %p325
      %p327 = pneg %p326
      // Predicated region
      $region57: #{space_time_model.1} parent=5 // pred_check
        _
      $region58: #{space_time_model.1} parent=5 // pred_check_branch
        %329 = sbr.rel (%p326) target = $region60
      $region59: #{space_time_model.1} parent=5 // pred_region
        %s330 = ssub.s32 %s19, 1
        %p331 = scmp.lt.s32.totalorder %s24, 1
        %s332 = scalar_select %p331, %s24, 1
        %s333 = smul.addr %s332, 32
        %s334 = smul.addr %s333, 8
        %s335 = scalar_lea.vmem %s0, %s334
        %p336 = pneg %p45
        %p337 = pneg %p42
        %p338 = scmp.lt.s32.totalorder %s24, 1
        %s339 = scalar_select %p338, %s24, 1
        %s340 = smul.addr %s339, 16
        %s341 = smul.addr %s340, 8
        %s342 = scalar_lea.vmem %s1, %s341
        %p343 = pneg %p71
        %p344 = pneg %p68
        %p345 = pneg %p92
        %p346 = pneg %p89
        %p347 = pneg %p113
        %p348 = pneg %p110
        %p349 = pneg %p134
        %p350 = pneg %p131
        %p351 = pneg %p155
        %p352 = pneg %p152
        %p353 = pneg %p176
        %p354 = pneg %p173
        %p355 = pneg %p197
        %p356 = pneg %p194
        %p357 = pneg %p218
        %p358 = pneg %p215
        %p359 = pneg %p239
        %p360 = pneg %p236
        %p361 = pneg %p265
        %p362 = pneg %p262
        %s363 = sand.u32 %s252, 1
        %s364 = scalar_lea.sflag [#allocation3], %s363
        %s365 = sand.u32 %s252, 1
        %s366 = scalar_lea.vmem [#allocation2], %s365
        %p367 = scmp.lt.s32.totalorder %s24, 1
        %s368 = scalar_select %p367, %s24, 1
        %s369 = smul.addr %s368, 32
        %s370 = smul.addr %s369, 8
        %s371 = scalar_lea.vmem %s0, %s370
        %p372 = scmp.lt.s32.totalorder %s24, 1
        %s373 = scalar_select %p372, %s24, 1
        %s374 = smul.addr %s373, 16
        %s375 = smul.addr %s374, 8
        %s376 = scalar_lea.vmem %s1, %s375
        %v377 = vld [vmem:[%s371] sm:$0xff]
        %v378 = vld [vmem:[%s371 + $0x8] sm:$0xff]
        %v379 = vld [vmem:[%s371 + $0x10] sm:$0xff]
        %v380 = vld [vmem:[%s371 + $0x18] sm:$0xff]
        %v381 = vld [vmem:[%s371 + $0x20] sm:$0xff]
        %v382 = vld [vmem:[%s371 + $0x28] sm:$0xff]
        %v383 = vld [vmem:[%s371 + $0x30] sm:$0xff]
        %v384 = vld [vmem:[%s371 + $0x38] sm:$0xff]
        %v385 = vld [vmem:[%s371 + $0x40] sm:$0xff]
        %v386 = vld [vmem:[%s371 + $0x48] sm:$0xff]
        %v387 = vld [vmem:[%s371 + $0x50] sm:$0xff]
        %v388 = vld [vmem:[%s371 + $0x58] sm:$0xff]
        %v389 = vld [vmem:[%s371 + $0x60] sm:$0xff]
        %v390 = vld [vmem:[%s371 + $0x68] sm:$0xff]
        %v391 = vld [vmem:[%s371 + $0x70] sm:$0xff]
        %v392 = vld [vmem:[%s371 + $0x78] sm:$0xff]
        %v393 = vld [vmem:[%s371 + $0x80] sm:$0xff]
        %v394 = vld [vmem:[%s371 + $0x88] sm:$0xff]
        %v395 = vld [vmem:[%s371 + $0x90] sm:$0xff]
        %v396 = vld [vmem:[%s371 + $0x98] sm:$0xff]
        %v397 = vld [vmem:[%s371 + $0xa0] sm:$0xff]
        %v398 = vld [vmem:[%s371 + $0xa8] sm:$0xff]
        %v399 = vld [vmem:[%s371 + $0xb0] sm:$0xff]
        %v400 = vld [vmem:[%s371 + $0xb8] sm:$0xff]
        %v401 = vld [vmem:[%s371 + $0xc0] sm:$0xff]
        %v402 = vld [vmem:[%s371 + $0xc8] sm:$0xff]
        %v403 = vld [vmem:[%s371 + $0xd0] sm:$0xff]
        %v404 = vld [vmem:[%s371 + $0xd8] sm:$0xff]
        %v405 = vld [vmem:[%s371 + $0xe0] sm:$0xff]
        %v406 = vld [vmem:[%s371 + $0xe8] sm:$0xff]
        %v407 = vld [vmem:[%s371 + $0xf0] sm:$0xff]
        %v408 = vld [vmem:[%s371 + $0xf8] sm:$0xff]
        %409 = vxpose.xlu0.b32.start [1/16] %v377, 128
        %410 = vxpose.xlu0.b32.cont [2/16] %v379, 128
        %411 = vxpose.xlu0.b32.cont [3/16] %v381, 128
        %412 = vxpose.xlu0.b32.cont [4/16] %v383, 128
        %413 = vxpose.xlu0.b32.cont [5/16] 0.0, 128
        %414 = vxpose.xlu0.b32.cont [6/16] 0.0, 128
        %415 = vxpose.xlu0.b32.cont [7/16] 0.0, 128
        %416 = vxpose.xlu0.b32.cont [8/16] 0.0, 128
        %417 = vxpose.xlu0.b32.cont [9/16] 0.0, 128
        %418 = vxpose.xlu0.b32.cont [10/16] 0.0, 128
        %419 = vxpose.xlu0.b32.cont [11/16] 0.0, 128
        %420 = vxpose.xlu0.b32.cont [12/16] 0.0, 128
        %421 = vxpose.xlu0.b32.cont [13/16] 0.0, 128
        %422 = vxpose.xlu0.b32.cont [14/16] 0.0, 128
        %423 = vxpose.xlu0.b32.cont [15/16] 0.0, 128
        %424 = vxpose.xlu0.b32.end [16/16] 0.0, 128
        %v425 = vpop.trf.xlu0
        %v426 = vpop.trf.xlu0
        %v427 = vpop.trf.xlu0
        %v428 = vpop.trf.xlu0
        %v429 = vpop.trf.xlu0
        %v430 = vpop.trf.xlu0
        %v431 = vpop.trf.xlu0
        %v432 = vpop.trf.xlu0
        %v433 = vpop.trf.xlu0
        %v434 = vpop.trf.xlu0
        %v435 = vpop.trf.xlu0
        %v436 = vpop.trf.xlu0
        %v437 = vpop.trf.xlu0
        %v438 = vpop.trf.xlu0
        %v439 = vpop.trf.xlu0
        %v440 = vpop.trf.xlu0
        %441 = vxpose.xlu0.b32.start [1/16] %v378, 128
        %442 = vxpose.xlu0.b32.cont [2/16] %v380, 128
        %443 = vxpose.xlu0.b32.cont [3/16] %v382, 128
        %444 = vxpose.xlu0.b32.cont [4/16] %v384, 128
        %445 = vxpose.xlu0.b32.cont [5/16] 0.0, 128
        %446 = vxpose.xlu0.b32.cont [6/16] 0.0, 128
        %447 = vxpose.xlu0.b32.cont [7/16] 0.0, 128
        %448 = vxpose.xlu0.b32.cont [8/16] 0.0, 128
        %449 = vxpose.xlu0.b32.cont [9/16] 0.0, 128
        %450 = vxpose.xlu0.b32.cont [10/16] 0.0, 128
        %451 = vxpose.xlu0.b32.cont [11/16] 0.0, 128
        %452 = vxpose.xlu0.b32.cont [12/16] 0.0, 128
        %453 = vxpose.xlu0.b32.cont [13/16] 0.0, 128
        %454 = vxpose.xlu0.b32.cont [14/16] 0.0, 128
        %455 = vxpose.xlu0.b32.cont [15/16] 0.0, 128
        %456 = vxpose.xlu0.b32.end [16/16] 0.0, 128
        %v457 = vpop.trf.xlu0
        %v458 = vpop.trf.xlu0
        %v459 = vpop.trf.xlu0
        %v460 = vpop.trf.xlu0
        %v461 = vpop.trf.xlu0
        %v462 = vpop.trf.xlu0
        %v463 = vpop.trf.xlu0
        %v464 = vpop.trf.xlu0
        %v465 = vpop.trf.xlu0
        %v466 = vpop.trf.xlu0
        %v467 = vpop.trf.xlu0
        %v468 = vpop.trf.xlu0
        %v469 = vpop.trf.xlu0
        %v470 = vpop.trf.xlu0
        %v471 = vpop.trf.xlu0
        %v472 = vpop.trf.xlu0
        %473 = vxpose.xlu0.b32.start [1/16] %v385, 128
        %474 = vxpose.xlu0.b32.cont [2/16] %v387, 128
        %475 = vxpose.xlu0.b32.cont [3/16] %v389, 128
        %476 = vxpose.xlu0.b32.cont [4/16] %v391, 128
        %477 = vxpose.xlu0.b32.cont [5/16] 0.0, 128
        %478 = vxpose.xlu0.b32.cont [6/16] 0.0, 128
        %479 = vxpose.xlu0.b32.cont [7/16] 0.0, 128
        %480 = vxpose.xlu0.b32.cont [8/16] 0.0, 128
        %481 = vxpose.xlu0.b32.cont [9/16] 0.0, 128
        %482 = vxpose.xlu0.b32.cont [10/16] 0.0, 128
        %483 = vxpose.xlu0.b32.cont [11/16] 0.0, 128
        %484 = vxpose.xlu0.b32.cont [12/16] 0.0, 128
        %485 = vxpose.xlu0.b32.cont [13/16] 0.0, 128
        %486 = vxpose.xlu0.b32.cont [14/16] 0.0, 128
        %487 = vxpose.xlu0.b32.cont [15/16] 0.0, 128
        %488 = vxpose.xlu0.b32.end [16/16] 0.0, 128
        %v489 = vpop.trf.xlu0
        %v490 = vpop.trf.xlu0
        %v491 = vpop.trf.xlu0
        %v492 = vpop.trf.xlu0
        %v493 = vpop.trf.xlu0
        %v494 = vpop.trf.xlu0
        %v495 = vpop.trf.xlu0
        %v496 = vpop.trf.xlu0
        %v497 = vpop.trf.xlu0
        %v498 = vpop.trf.xlu0
        %v499 = vpop.trf.xlu0
        %v500 = vpop.trf.xlu0
        %v501 = vpop.trf.xlu0
        %v502 = vpop.trf.xlu0
        %v503 = vpop.trf.xlu0
        %v504 = vpop.trf.xlu0
        %505 = vxpose.xlu0.b32.start [1/16] %v386, 128
        %506 = vxpose.xlu0.b32.cont [2/16] %v388, 128
        %507 = vxpose.xlu0.b32.cont [3/16] %v390, 128
        %508 = vxpose.xlu0.b32.cont [4/16] %v392, 128
        %509 = vxpose.xlu0.b32.cont [5/16] 0.0, 128
        %510 = vxpose.xlu0.b32.cont [6/16] 0.0, 128
        %511 = vxpose.xlu0.b32.cont [7/16] 0.0, 128
        %512 = vxpose.xlu0.b32.cont [8/16] 0.0, 128
        %513 = vxpose.xlu0.b32.cont [9/16] 0.0, 128
        %514 = vxpose.xlu0.b32.cont [10/16] 0.0, 128
        %515 = vxpose.xlu0.b32.cont [11/16] 0.0, 128
        %516 = vxpose.xlu0.b32.cont [12/16] 0.0, 128
        %517 = vxpose.xlu0.b32.cont [13/16] 0.0, 128
        %518 = vxpose.xlu0.b32.cont [14/16] 0.0, 128
        %519 = vxpose.xlu0.b32.cont [15/16] 0.0, 128
        %520 = vxpose.xlu0.b32.end [16/16] 0.0, 128
        %v521 = vpop.trf.xlu0
        %v522 = vpop.trf.xlu0
        %v523 = vpop.trf.xlu0
        %v524 = vpop.trf.xlu0
        %v525 = vpop.trf.xlu0
        %v526 = vpop.trf.xlu0
        %v527 = vpop.trf.xlu0
        %v528 = vpop.trf.xlu0
        %v529 = vpop.trf.xlu0
        %v530 = vpop.trf.xlu0
        %v531 = vpop.trf.xlu0
        %v532 = vpop.trf.xlu0
        %v533 = vpop.trf.xlu0
        %v534 = vpop.trf.xlu0
        %v535 = vpop.trf.xlu0
        %v536 = vpop.trf.xlu0
        %537 = vxpose.xlu0.b32.start [1/16] %v393, 128
        %538 = vxpose.xlu0.b32.cont [2/16] %v395, 128
        %539 = vxpose.xlu0.b32.cont [3/16] %v397, 128
        %540 = vxpose.xlu0.b32.cont [4/16] %v399, 128
        %541 = vxpose.xlu0.b32.cont [5/16] 0.0, 128
        %542 = vxpose.xlu0.b32.cont [6/16] 0.0, 128
        %543 = vxpose.xlu0.b32.cont [7/16] 0.0, 128
        %544 = vxpose.xlu0.b32.cont [8/16] 0.0, 128
        %545 = vxpose.xlu0.b32.cont [9/16] 0.0, 128
        %546 = vxpose.xlu0.b32.cont [10/16] 0.0, 128
        %547 = vxpose.xlu0.b32.cont [11/16] 0.0, 128
        %548 = vxpose.xlu0.b32.cont [12/16] 0.0, 128
        %549 = vxpose.xlu0.b32.cont [13/16] 0.0, 128
        %550 = vxpose.xlu0.b32.cont [14/16] 0.0, 128
        %551 = vxpose.xlu0.b32.cont [15/16] 0.0, 128
        %552 = vxpose.xlu0.b32.end [16/16] 0.0, 128
        %v553 = vpop.trf.xlu0
        %v554 = vpop.trf.xlu0
        %v555 = vpop.trf.xlu0
        %v556 = vpop.trf.xlu0
        %v557 = vpop.trf.xlu0
        %v558 = vpop.trf.xlu0
        %v559 = vpop.trf.xlu0
        %v560 = vpop.trf.xlu0
        %v561 = vpop.trf.xlu0
        %v562 = vpop.trf.xlu0
        %v563 = vpop.trf.xlu0
        %v564 = vpop.trf.xlu0
        %v565 = vpop.trf.xlu0
        %v566 = vpop.trf.xlu0
        %v567 = vpop.trf.xlu0
        %v568 = vpop.trf.xlu0
        %569 = vxpose.xlu0.b32.start [1/16] %v394, 128
        %570 = vxpose.xlu0.b32.cont [2/16] %v396, 128
        %571 = vxpose.xlu0.b32.cont [3/16] %v398, 128
        %572 = vxpose.xlu0.b32.cont [4/16] %v400, 128
        %573 = vxpose.xlu0.b32.cont [5/16] 0.0, 128
        %574 = vxpose.xlu0.b32.cont [6/16] 0.0, 128
        %575 = vxpose.xlu0.b32.cont [7/16] 0.0, 128
        %576 = vxpose.xlu0.b32.cont [8/16] 0.0, 128
        %577 = vxpose.xlu0.b32.cont [9/16] 0.0, 128
        %578 = vxpose.xlu0.b32.cont [10/16] 0.0, 128
        %579 = vxpose.xlu0.b32.cont [11/16] 0.0, 128
        %580 = vxpose.xlu0.b32.cont [12/16] 0.0, 128
        %581 = vxpose.xlu0.b32.cont [13/16] 0.0, 128
        %582 = vxpose.xlu0.b32.cont [14/16] 0.0, 128
        %583 = vxpose.xlu0.b32.cont [15/16] 0.0, 128
        %584 = vxpose.xlu0.b32.end [16/16] 0.0, 128
        %v585 = vpop.trf.xlu0
        %v586 = vpop.trf.xlu0
        %v587 = vpop.trf.xlu0
        %v588 = vpop.trf.xlu0
        %v589 = vpop.trf.xlu0
        %v590 = vpop.trf.xlu0
        %v591 = vpop.trf.xlu0
        %v592 = vpop.trf.xlu0
        %v593 = vpop.trf.xlu0
        %v594 = vpop.trf.xlu0
        %v595 = vpop.trf.xlu0
        %v596 = vpop.trf.xlu0
        %v597 = vpop.trf.xlu0
        %v598 = vpop.trf.xlu0
        %v599 = vpop.trf.xlu0
        %v600 = vpop.trf.xlu0
        %601 = vxpose.xlu0.b32.start [1/16] %v401, 128
        %602 = vxpose.xlu0.b32.cont [2/16] %v403, 128
        %603 = vxpose.xlu0.b32.cont [3/16] %v405, 128
        %604 = vxpose.xlu0.b32.cont [4/16] %v407, 128
        %605 = vxpose.xlu0.b32.cont [5/16] 0.0, 128
        %606 = vxpose.xlu0.b32.cont [6/16] 0.0, 128
        %607 = vxpose.xlu0.b32.cont [7/16] 0.0, 128
        %608 = vxpose.xlu0.b32.cont [8/16] 0.0, 128
        %609 = vxpose.xlu0.b32.cont [9/16] 0.0, 128
        %610 = vxpose.xlu0.b32.cont [10/16] 0.0, 128
        %611 = vxpose.xlu0.b32.cont [11/16] 0.0, 128
        %612 = vxpose.xlu0.b32.cont [12/16] 0.0, 128
        %613 = vxpose.xlu0.b32.cont [13/16] 0.0, 128
        %614 = vxpose.xlu0.b32.cont [14/16] 0.0, 128
        %615 = vxpose.xlu0.b32.cont [15/16] 0.0, 128
        %616 = vxpose.xlu0.b32.end [16/16] 0.0, 128
        %v617 = vpop.trf.xlu0
        %v618 = vpop.trf.xlu0
        %v619 = vpop.trf.xlu0
        %v620 = vpop.trf.xlu0
        %v621 = vpop.trf.xlu0
        %v622 = vpop.trf.xlu0
        %v623 = vpop.trf.xlu0
        %v624 = vpop.trf.xlu0
        %v625 = vpop.trf.xlu0
        %v626 = vpop.trf.xlu0
        %v627 = vpop.trf.xlu0
        %v628 = vpop.trf.xlu0
        %v629 = vpop.trf.xlu0
        %v630 = vpop.trf.xlu0
        %v631 = vpop.trf.xlu0
        %v632 = vpop.trf.xlu0
        %633 = vxpose.xlu0.b32.start [1/16] %v402, 128
        %634 = vxpose.xlu0.b32.cont [2/16] %v404, 128
        %635 = vxpose.xlu0.b32.cont [3/16] %v406, 128
        %636 = vxpose.xlu0.b32.cont [4/16] %v408, 128
        %637 = vxpose.xlu0.b32.cont [5/16] 0.0, 128
        %638 = vxpose.xlu0.b32.cont [6/16] 0.0, 128
        %639 = vxpose.xlu0.b32.cont [7/16] 0.0, 128
        %640 = vxpose.xlu0.b32.cont [8/16] 0.0, 128
        %641 = vxpose.xlu0.b32.cont [9/16] 0.0, 128
        %642 = vxpose.xlu0.b32.cont [10/16] 0.0, 128
        %643 = vxpose.xlu0.b32.cont [11/16] 0.0, 128
        %644 = vxpose.xlu0.b32.cont [12/16] 0.0, 128
        %645 = vxpose.xlu0.b32.cont [13/16] 0.0, 128
        %646 = vxpose.xlu0.b32.cont [14/16] 0.0, 128
        %647 = vxpose.xlu0.b32.cont [15/16] 0.0, 128
        %648 = vxpose.xlu0.b32.end [16/16] 0.0, 128
        %v649 = vpop.trf.xlu0
        %v650 = vpop.trf.xlu0
        %v651 = vpop.trf.xlu0
        %v652 = vpop.trf.xlu0
        %v653 = vpop.trf.xlu0
        %v654 = vpop.trf.xlu0
        %v655 = vpop.trf.xlu0
        %v656 = vpop.trf.xlu0
        %v657 = vpop.trf.xlu0
        %v658 = vpop.trf.xlu0
        %v659 = vpop.trf.xlu0
        %v660 = vpop.trf.xlu0
        %v661 = vpop.trf.xlu0
        %v662 = vpop.trf.xlu0
        %v663 = vpop.trf.xlu0
        %v664 = vpop.trf.xlu0
        %v665 = vld [vmem:[%s376] sm:$0xff]
        %v666 = vld [vmem:[%s376 + $0x8] sm:$0xff]
        %v667 = vld [vmem:[%s376 + $0x10] sm:$0xff]
        %v668 = vld [vmem:[%s376 + $0x18] sm:$0xff]
        %v669 = vld [vmem:[%s376 + $0x20] sm:$0xff]
        %v670 = vld [vmem:[%s376 + $0x28] sm:$0xff]
        %v671 = vld [vmem:[%s376 + $0x30] sm:$0xff]
        %v672 = vld [vmem:[%s376 + $0x38] sm:$0xff]
        %v673 = vld [vmem:[%s376 + $0x40] sm:$0xff]
        %v674 = vld [vmem:[%s376 + $0x48] sm:$0xff]
        %v675 = vld [vmem:[%s376 + $0x50] sm:$0xff]
        %v676 = vld [vmem:[%s376 + $0x58] sm:$0xff]
        %v677 = vld [vmem:[%s376 + $0x60] sm:$0xff]
        %v678 = vld [vmem:[%s376 + $0x68] sm:$0xff]
        %v679 = vld [vmem:[%s376 + $0x70] sm:$0xff]
        %v680 = vld [vmem:[%s376 + $0x78] sm:$0xff]
        %681 = vmatprep.subr.mxu0 0.0
        %682 = vmatpush1.msra.mxu0 %v440
        %683 = vmatprep.subr.mxu0 0.0
        %684 = vmatpush1.msra.mxu0 %v439
        %685 = vmatprep.subr.mxu0 0.0
        %686 = vmatpush1.msra.mxu0 %v438
        %687 = vmatprep.subr.mxu0 0.0
        %688 = vmatpush1.msra.mxu0 %v437
        %689 = vmatprep.subr.mxu0 0.0
        %690 = vmatpush1.msra.mxu0 %v436
        %691 = vmatprep.subr.mxu0 0.0
        %692 = vmatpush1.msra.mxu0 %v435
        %693 = vmatprep.subr.mxu0 0.0
        %694 = vmatpush1.msra.mxu0 %v434
        %695 = vmatprep.subr.mxu0 0.0
        %696 = vmatpush1.msra.mxu0 %v433
        %697 = vmatprep.subr.mxu0 0.0
        %698 = vmatpush1.msra.mxu0 %v432
        %699 = vmatprep.subr.mxu0 0.0
        %700 = vmatpush1.msra.mxu0 %v431
        %701 = vmatprep.subr.mxu0 0.0
        %702 = vmatpush1.msra.mxu0 %v430
        %703 = vmatprep.subr.mxu0 0.0
        %704 = vmatpush1.msra.mxu0 %v429
        %705 = vmatprep.subr.mxu0 0.0
        %706 = vmatpush1.msra.mxu0 %v428
        %707 = vmatprep.subr.mxu0 0.0
        %708 = vmatpush1.msra.mxu0 %v427
        %709 = vmatprep.subr.mxu0 0.0
        %710 = vmatpush1.msra.mxu0 %v426
        %711 = vmatprep.subr.mxu0 0.0
        %712 = vmatpush1.msra.mxu0 %v425
        %713 = vmatprep.subr.mxu0 0.0
        %714 = vmatpush2.msra.mxu0 %v472
        %715 = vmatprep.subr.mxu0 0.0
        %716 = vmatpush2.msra.mxu0 %v471
        %717 = vmatprep.subr.mxu0 0.0
        %718 = vmatpush2.msra.mxu0 %v470
        %719 = vmatprep.subr.mxu0 0.0
        %720 = vmatpush2.msra.mxu0 %v469
        %721 = vmatprep.subr.mxu0 0.0
        %722 = vmatpush2.msra.mxu0 %v468
        %723 = vmatprep.subr.mxu0 0.0
        %724 = vmatpush2.msra.mxu0 %v467
        %725 = vmatprep.subr.mxu0 0.0
        %726 = vmatpush2.msra.mxu0 %v466
        %727 = vmatprep.subr.mxu0 0.0
        %728 = vmatpush2.msra.mxu0 %v465
        %729 = vmatprep.subr.mxu0 0.0
        %730 = vmatpush2.msra.mxu0 %v464
        %731 = vmatprep.subr.mxu0 0.0
        %732 = vmatpush2.msra.mxu0 %v463
        %733 = vmatprep.subr.mxu0 0.0
        %734 = vmatpush2.msra.mxu0 %v462
        %735 = vmatprep.subr.mxu0 0.0
        %736 = vmatpush2.msra.mxu0 %v461
        %737 = vmatprep.subr.mxu0 0.0
        %738 = vmatpush2.msra.mxu0 %v460
        %739 = vmatprep.subr.mxu0 0.0
        %740 = vmatpush2.msra.mxu0 %v459
        %741 = vmatprep.subr.mxu0 0.0
        %742 = vmatpush2.msra.mxu0 %v458
        %743 = vmatprep.subr.mxu0 0.0
        %744 = vmatpush2.msra.mxu0 %v457
        %745 = vmatprep.mubr.f32.mxu0 %v666
        %746 = vmatmul.mubr.f32.gmra.mxu0 %v665
        %v747 = vpop.f32.mrf.mxu0
        %v748 = vadd.f32 0.0, %v747
        %v749 = vpop.f32.mrf.mxu0
        %750 = vmatprep.mubr.f32.mxu0 %v668
        %751 = vmatmul.mubr.f32.gmra.mxu0 %v667
        %v752 = vpop.f32.mrf.mxu0
        %v753 = vadd.f32 0.0, %v752
        %v754 = vpop.f32.mrf.mxu0
        %755 = vdwg.mxu0
        %756 = vmatprep.subr.mxu0 0.0
        %757 = vmatpush1.msra.mxu0 %v504
        %758 = vmatprep.subr.mxu0 0.0
        %759 = vmatpush1.msra.mxu0 %v503
        %760 = vmatprep.subr.mxu0 0.0
        %761 = vmatpush1.msra.mxu0 %v502
        %762 = vmatprep.subr.mxu0 0.0
        %763 = vmatpush1.msra.mxu0 %v501
        %764 = vmatprep.subr.mxu0 0.0
        %765 = vmatpush1.msra.mxu0 %v500
        %766 = vmatprep.subr.mxu0 0.0
        %767 = vmatpush1.msra.mxu0 %v499
        %768 = vmatprep.subr.mxu0 0.0
        %769 = vmatpush1.msra.mxu0 %v498
        %770 = vmatprep.subr.mxu0 0.0
        %771 = vmatpush1.msra.mxu0 %v497
        %772 = vmatprep.subr.mxu0 0.0
        %773 = vmatpush1.msra.mxu0 %v496
        %774 = vmatprep.subr.mxu0 0.0
        %775 = vmatpush1.msra.mxu0 %v495
        %776 = vmatprep.subr.mxu0 0.0
        %777 = vmatpush1.msra.mxu0 %v494
        %778 = vmatprep.subr.mxu0 0.0
        %779 = vmatpush1.msra.mxu0 %v493
        %780 = vmatprep.subr.mxu0 0.0
        %781 = vmatpush1.msra.mxu0 %v492
        %782 = vmatprep.subr.mxu0 0.0
        %783 = vmatpush1.msra.mxu0 %v491
        %784 = vmatprep.subr.mxu0 0.0
        %785 = vmatpush1.msra.mxu0 %v490
        %786 = vmatprep.subr.mxu0 0.0
        %787 = vmatpush1.msra.mxu0 %v489
        %788 = vmatprep.subr.mxu0 0.0
        %789 = vmatpush2.msra.mxu0 %v536
        %790 = vmatprep.subr.mxu0 0.0
        %791 = vmatpush2.msra.mxu0 %v535
        %792 = vmatprep.subr.mxu0 0.0
        %793 = vmatpush2.msra.mxu0 %v534
        %794 = vmatprep.subr.mxu0 0.0
        %795 = vmatpush2.msra.mxu0 %v533
        %796 = vmatprep.subr.mxu0 0.0
        %797 = vmatpush2.msra.mxu0 %v532
        %798 = vmatprep.subr.mxu0 0.0
        %799 = vmatpush2.msra.mxu0 %v531
        %800 = vmatprep.subr.mxu0 0.0
        %801 = vmatpush2.msra.mxu0 %v530
        %802 = vmatprep.subr.mxu0 0.0
        %803 = vmatpush2.msra.mxu0 %v529
        %804 = vmatprep.subr.mxu0 0.0
        %805 = vmatpush2.msra.mxu0 %v528
        %806 = vmatprep.subr.mxu0 0.0
        %807 = vmatpush2.msra.mxu0 %v527
        %808 = vmatprep.subr.mxu0 0.0
        %809 = vmatpush2.msra.mxu0 %v526
        %810 = vmatprep.subr.mxu0 0.0
        %811 = vmatpush2.msra.mxu0 %v525
        %812 = vmatprep.subr.mxu0 0.0
        %813 = vmatpush2.msra.mxu0 %v524
        %814 = vmatprep.subr.mxu0 0.0
        %815 = vmatpush2.msra.mxu0 %v523
        %816 = vmatprep.subr.mxu0 0.0
        %817 = vmatpush2.msra.mxu0 %v522
        %818 = vmatprep.subr.mxu0 0.0
        %819 = vmatpush2.msra.mxu0 %v521
        %820 = vmatprep.mubr.f32.mxu0 %v670
        %821 = vmatmul.mubr.f32.gmra.mxu0 %v669
        %v822 = vpop.f32.mrf.mxu0
        %v823 = vadd.f32 0.0, %v822
        %v824 = vpop.f32.mrf.mxu0
        %825 = vmatprep.mubr.f32.mxu0 %v672
        %826 = vmatmul.mubr.f32.gmra.mxu0 %v671
        %v827 = vpop.f32.mrf.mxu0
        %v828 = vadd.f32 0.0, %v827
        %v829 = vpop.f32.mrf.mxu0
        %830 = vdwg.mxu0
        %831 = vmatprep.subr.mxu0 0.0
        %832 = vmatpush1.msra.mxu0 %v568
        %833 = vmatprep.subr.mxu0 0.0
        %834 = vmatpush1.msra.mxu0 %v567
        %835 = vmatprep.subr.mxu0 0.0
        %836 = vmatpush1.msra.mxu0 %v566
        %837 = vmatprep.subr.mxu0 0.0
        %838 = vmatpush1.msra.mxu0 %v565
        %839 = vmatprep.subr.mxu0 0.0
        %840 = vmatpush1.msra.mxu0 %v564
        %841 = vmatprep.subr.mxu0 0.0
        %842 = vmatpush1.msra.mxu0 %v563
        %843 = vmatprep.subr.mxu0 0.0
        %844 = vmatpush1.msra.mxu0 %v562
        %845 = vmatprep.subr.mxu0 0.0
        %846 = vmatpush1.msra.mxu0 %v561
        %847 = vmatprep.subr.mxu0 0.0
        %848 = vmatpush1.msra.mxu0 %v560
        %849 = vmatprep.subr.mxu0 0.0
        %850 = vmatpush1.msra.mxu0 %v559
        %851 = vmatprep.subr.mxu0 0.0
        %852 = vmatpush1.msra.mxu0 %v558
        %853 = vmatprep.subr.mxu0 0.0
        %854 = vmatpush1.msra.mxu0 %v557
        %855 = vmatprep.subr.mxu0 0.0
        %856 = vmatpush1.msra.mxu0 %v556
        %857 = vmatprep.subr.mxu0 0.0
        %858 = vmatpush1.msra.mxu0 %v555
        %859 = vmatprep.subr.mxu0 0.0
        %860 = vmatpush1.msra.mxu0 %v554
        %861 = vmatprep.subr.mxu0 0.0
        %862 = vmatpush1.msra.mxu0 %v553
        %863 = vmatprep.subr.mxu0 0.0
        %864 = vmatpush2.msra.mxu0 %v600
        %865 = vmatprep.subr.mxu0 0.0
        %866 = vmatpush2.msra.mxu0 %v599
        %867 = vmatprep.subr.mxu0 0.0
        %868 = vmatpush2.msra.mxu0 %v598
        %869 = vmatprep.subr.mxu0 0.0
        %870 = vmatpush2.msra.mxu0 %v597
        %871 = vmatprep.subr.mxu0 0.0
        %872 = vmatpush2.msra.mxu0 %v596
        %873 = vmatprep.subr.mxu0 0.0
        %874 = vmatpush2.msra.mxu0 %v595
        %875 = vmatprep.subr.mxu0 0.0
        %876 = vmatpush2.msra.mxu0 %v594
        %877 = vmatprep.subr.mxu0 0.0
        %878 = vmatpush2.msra.mxu0 %v593
        %879 = vmatprep.subr.mxu0 0.0
        %880 = vmatpush2.msra.mxu0 %v592
        %881 = vmatprep.subr.mxu0 0.0
        %882 = vmatpush2.msra.mxu0 %v591
        %883 = vmatprep.subr.mxu0 0.0
        %884 = vmatpush2.msra.mxu0 %v590
        %885 = vmatprep.subr.mxu0 0.0
        %886 = vmatpush2.msra.mxu0 %v589
        %887 = vmatprep.subr.mxu0 0.0
        %888 = vmatpush2.msra.mxu0 %v588
        %889 = vmatprep.subr.mxu0 0.0
        %890 = vmatpush2.msra.mxu0 %v587
        %891 = vmatprep.subr.mxu0 0.0
        %892 = vmatpush2.msra.mxu0 %v586
        %893 = vmatprep.subr.mxu0 0.0
        %894 = vmatpush2.msra.mxu0 %v585
        %895 = vmatprep.mubr.f32.mxu0 %v674
        %896 = vmatmul.mubr.f32.gmra.mxu0 %v673
        %v897 = vpop.f32.mrf.mxu0
        %v898 = vadd.f32 0.0, %v897
        %v899 = vpop.f32.mrf.mxu0
        %900 = vmatprep.mubr.f32.mxu0 %v676
        %901 = vmatmul.mubr.f32.gmra.mxu0 %v675
        %v902 = vpop.f32.mrf.mxu0
        %v903 = vadd.f32 0.0, %v902
        %v904 = vpop.f32.mrf.mxu0
        %905 = vdwg.mxu0
        %906 = vmatprep.subr.mxu0 0.0
        %907 = vmatpush1.msra.mxu0 %v632
        %908 = vmatprep.subr.mxu0 0.0
        %909 = vmatpush1.msra.mxu0 %v631
        %910 = vmatprep.subr.mxu0 0.0
        %911 = vmatpush1.msra.mxu0 %v630
        %912 = vmatprep.subr.mxu0 0.0
        %913 = vmatpush1.msra.mxu0 %v629
        %914 = vmatprep.subr.mxu0 0.0
        %915 = vmatpush1.msra.mxu0 %v628
        %916 = vmatprep.subr.mxu0 0.0
        %917 = vmatpush1.msra.mxu0 %v627
        %918 = vmatprep.subr.mxu0 0.0
        %919 = vmatpush1.msra.mxu0 %v626
        %920 = vmatprep.subr.mxu0 0.0
        %921 = vmatpush1.msra.mxu0 %v625
        %922 = vmatprep.subr.mxu0 0.0
        %923 = vmatpush1.msra.mxu0 %v624
        %924 = vmatprep.subr.mxu0 0.0
        %925 = vmatpush1.msra.mxu0 %v623
        %926 = vmatprep.subr.mxu0 0.0
        %927 = vmatpush1.msra.mxu0 %v622
        %928 = vmatprep.subr.mxu0 0.0
        %929 = vmatpush1.msra.mxu0 %v621
        %930 = vmatprep.subr.mxu0 0.0
        %931 = vmatpush1.msra.mxu0 %v620
        %932 = vmatprep.subr.mxu0 0.0
        %933 = vmatpush1.msra.mxu0 %v619
        %934 = vmatprep.subr.mxu0 0.0
        %935 = vmatpush1.msra.mxu0 %v618
        %936 = vmatprep.subr.mxu0 0.0
        %937 = vmatpush1.msra.mxu0 %v617
        %938 = vmatprep.subr.mxu0 0.0
        %939 = vmatpush2.msra.mxu0 %v664
        %940 = vmatprep.subr.mxu0 0.0
        %941 = vmatpush2.msra.mxu0 %v663
        %942 = vmatprep.subr.mxu0 0.0
        %943 = vmatpush2.msra.mxu0 %v662
        %944 = vmatprep.subr.mxu0 0.0
        %945 = vmatpush2.msra.mxu0 %v661
        %946 = vmatprep.subr.mxu0 0.0
        %947 = vmatpush2.msra.mxu0 %v660
        %948 = vmatprep.subr.mxu0 0.0
        %949 = vmatpush2.msra.mxu0 %v659
        %950 = vmatprep.subr.mxu0 0.0
        %951 = vmatpush2.msra.mxu0 %v658
        %952 = vmatprep.subr.mxu0 0.0
        %953 = vmatpush2.msra.mxu0 %v657
        %954 = vmatprep.subr.mxu0 0.0
        %955 = vmatpush2.msra.mxu0 %v656
        %956 = vmatprep.subr.mxu0 0.0
        %957 = vmatpush2.msra.mxu0 %v655
        %958 = vmatprep.subr.mxu0 0.0
        %959 = vmatpush2.msra.mxu0 %v654
        %960 = vmatprep.subr.mxu0 0.0
        %961 = vmatpush2.msra.mxu0 %v653
        %962 = vmatprep.subr.mxu0 0.0
        %963 = vmatpush2.msra.mxu0 %v652
        %964 = vmatprep.subr.mxu0 0.0
        %965 = vmatpush2.msra.mxu0 %v651
        %966 = vmatprep.subr.mxu0 0.0
        %967 = vmatpush2.msra.mxu0 %v650
        %968 = vmatprep.subr.mxu0 0.0
        %969 = vmatpush2.msra.mxu0 %v649
        %970 = vmatprep.mubr.f32.mxu0 %v678
        %971 = vmatmul.mubr.f32.gmra.mxu0 %v677
        %v972 = vpop.f32.mrf.mxu0
        %v973 = vadd.f32 0.0, %v972
        %v974 = vpop.f32.mrf.mxu0
        %975 = vmatprep.mubr.f32.mxu0 %v680
        %976 = vmatmul.mubr.f32.gmra.mxu0 %v679
        %v977 = vpop.f32.mrf.mxu0
        %v978 = vadd.f32 0.0, %v977
        %v979 = vpop.f32.mrf.mxu0
        %980 = vdwg.mxu0
        %v981 = vld [vmem:[%s2] sm:$0xff]
        %v982 = vld [vmem:[%s2 + $0x8] sm:$0xff]
        %v983 = vld [vmem:[%s2 + $0x10] sm:$0xff]
        %v984 = vld [vmem:[%s2 + $0x18] sm:$0xff]
        %v985 = vld [vmem:[%s3] sm:$0x1]
        %v987 = vlaneseq
        %v988 = vshrl.u32 %v987, 7
        %v989 = vsub.s32 0, %v988
        %v990 = vrot.slane %v985, %v989
        %vm992 = vcmask 261120
        %v994 = vsel %vm992, %v748, 0
        %v997 = vsel %vm992, %v753, 0
        %v1000 = vsel %vm992, %v823, 0
        %v1003 = vsel %vm992, %v828, 0
        %v1006 = vsel %vm992, %v898, 0
        %v1009 = vsel %vm992, %v903, 0
        %v1012 = vsel %vm992, %v973, 0
        %v1015 = vsel %vm992, %v978, 0
        %1017 = vmatprep.subr.mxu0 0.0
        %1018 = vmatpush1.msra.mxu0 0.0
        %1019 = vmatprep.subr.mxu0 0.0
        %1020 = vmatpush1.msra.mxu0 0.0
        %1021 = vmatprep.subr.mxu0 0.0
        %1022 = vmatpush1.msra.mxu0 0.0
        %1023 = vmatprep.subr.mxu0 0.0
        %1024 = vmatpush1.msra.mxu0 0.0
        %1025 = vmatprep.subr.mxu0 0.0
        %1026 = vmatpush1.msra.mxu0 0.0
        %1027 = vmatprep.subr.mxu0 0.0
        %1028 = vmatpush1.msra.mxu0 0.0
        %1029 = vmatprep.subr.mxu0 0.0
        %1030 = vmatpush1.msra.mxu0 0.0
        %1031 = vmatprep.subr.mxu0 0.0
        %1032 = vmatpush1.msra.mxu0 0.0
        %1033 = vmatprep.subr.mxu0 0.0
        %1034 = vmatpush1.msra.mxu0 0.0
        %1035 = vmatprep.subr.mxu0 0.0
        %1036 = vmatpush1.msra.mxu0 0.0
        %1037 = vmatprep.subr.mxu0 0.0
        %1038 = vmatpush1.msra.mxu0 0.0
        %1039 = vmatprep.subr.mxu0 0.0
        %1040 = vmatpush1.msra.mxu0 0.0
        %1041 = vmatprep.subr.mxu0 0.0
        %1042 = vmatpush1.msra.mxu0 %v984
        %1043 = vmatprep.subr.mxu0 0.0
        %1044 = vmatpush1.msra.mxu0 %v983
        %1045 = vmatprep.subr.mxu0 0.0
        %1046 = vmatpush1.msra.mxu0 %v982
        %1047 = vmatprep.subr.mxu0 0.0
        %1048 = vmatpush1.msra.mxu0 %v981
        %1049 = vmatprep.subr.mxu0 0.0
        %1050 = vmatpush2.msra.mxu0 0.0
        %1051 = vmatprep.subr.mxu0 0.0
        %1052 = vmatpush2.msra.mxu0 0.0
        %1053 = vmatprep.subr.mxu0 0.0
        %1054 = vmatpush2.msra.mxu0 0.0
        %1055 = vmatprep.subr.mxu0 0.0
        %1056 = vmatpush2.msra.mxu0 0.0
        %1057 = vmatprep.subr.mxu0 0.0
        %1058 = vmatpush2.msra.mxu0 0.0
        %1059 = vmatprep.subr.mxu0 0.0
        %1060 = vmatpush2.msra.mxu0 0.0
        %1061 = vmatprep.subr.mxu0 0.0
        %1062 = vmatpush2.msra.mxu0 0.0
        %1063 = vmatprep.subr.mxu0 0.0
        %1064 = vmatpush2.msra.mxu0 0.0
        %1065 = vmatprep.subr.mxu0 0.0
        %1066 = vmatpush2.msra.mxu0 0.0
        %1067 = vmatprep.subr.mxu0 0.0
        %1068 = vmatpush2.msra.mxu0 0.0
        %1069 = vmatprep.subr.mxu0 0.0
        %1070 = vmatpush2.msra.mxu0 0.0
        %1071 = vmatprep.subr.mxu0 0.0
        %1072 = vmatpush2.msra.mxu0 0.0
        %1073 = vmatprep.subr.mxu0 0.0
        %1074 = vmatpush2.msra.mxu0 0.0
        %1075 = vmatprep.subr.mxu0 0.0
        %1076 = vmatpush2.msra.mxu0 0.0
        %1077 = vmatprep.subr.mxu0 0.0
        %1078 = vmatpush2.msra.mxu0 0.0
        %1079 = vmatprep.subr.mxu0 0.0
        %1080 = vmatpush2.msra.mxu0 0.0
        %1081 = vmatprep.mubr.f32.mxu0 0.0
        %1082 = vmatmul.mubr.f32.gmra.mxu0 %v994
        %v1083 = vpop.f32.mrf.mxu0
        %v1084 = vadd.f32 %v990, %v1083
        %v1085 = vpop.f32.mrf.mxu0
        %1086 = vmatprep.mubr.f32.mxu0 0.0
        %1087 = vmatmul.mubr.f32.gmra.mxu0 %v997
        %v1088 = vpop.f32.mrf.mxu0
        %v1089 = vadd.f32 %v990, %v1088
        %v1090 = vpop.f32.mrf.mxu0
        %1091 = vmatprep.mubr.f32.mxu0 0.0
        %1092 = vmatmul.mubr.f32.gmra.mxu0 %v1000
        %v1093 = vpop.f32.mrf.mxu0
        %v1094 = vadd.f32 %v990, %v1093
        %v1095 = vpop.f32.mrf.mxu0
        %1096 = vmatprep.mubr.f32.mxu0 0.0
        %1097 = vmatmul.mubr.f32.gmra.mxu0 %v1003
        %v1098 = vpop.f32.mrf.mxu0
        %v1099 = vadd.f32 %v990, %v1098
        %v1100 = vpop.f32.mrf.mxu0
        %1101 = vmatprep.mubr.f32.mxu0 0.0
        %1102 = vmatmul.mubr.f32.gmra.mxu0 %v1006
        %v1103 = vpop.f32.mrf.mxu0
        %v1104 = vadd.f32 %v990, %v1103
        %v1105 = vpop.f32.mrf.mxu0
        %1106 = vmatprep.mubr.f32.mxu0 0.0
        %1107 = vmatmul.mubr.f32.gmra.mxu0 %v1009
        %v1108 = vpop.f32.mrf.mxu0
        %v1109 = vadd.f32 %v990, %v1108
        %v1110 = vpop.f32.mrf.mxu0
        %1111 = vmatprep.mubr.f32.mxu0 0.0
        %1112 = vmatmul.mubr.f32.gmra.mxu0 %v1012
        %v1113 = vpop.f32.mrf.mxu0
        %v1114 = vadd.f32 %v990, %v1113
        %v1115 = vpop.f32.mrf.mxu0
        %1116 = vmatprep.mubr.f32.mxu0 0.0
        %1117 = vmatmul.mubr.f32.gmra.mxu0 %v1015
        %v1118 = vpop.f32.mrf.mxu0
        %v1119 = vadd.f32 %v990, %v1118
        %v1120 = vpop.f32.mrf.mxu0
        %1121 = vdwg.mxu0
        %v1122 = vmax.f32 %v1084, 0.0
        %v1123 = vmax.f32 %v1089, 0.0
        %v1124 = vmax.f32 %v1094, 0.0
        %v1125 = vmax.f32 %v1099, 0.0
        %v1126 = vmax.f32 %v1104, 0.0
        %v1127 = vmax.f32 %v1109, 0.0
        %v1128 = vmax.f32 %v1114, 0.0
        %v1129 = vmax.f32 %v1119, 0.0
        %v1130 = vld [vmem:[%s4] sm:$0xff]
        %v1131 = vld [vmem:[%s4 + $0x8] sm:$0xff]
        %v1132 = vld [vmem:[%s4 + $0x10] sm:$0xff]
        %v1133 = vld [vmem:[%s4 + $0x18] sm:$0xff]
        %v1134 = vld [vmem:[%s4 + $0x20] sm:$0xff]
        %v1135 = vld [vmem:[%s4 + $0x28] sm:$0xff]
        %v1136 = vld [vmem:[%s4 + $0x30] sm:$0xff]
        %v1137 = vld [vmem:[%s4 + $0x38] sm:$0xff]
        %vm1138 = vcmask 523264
        %v1140 = vsel %vm1138, %v1130, 0
        %v1143 = vsel %vm1138, %v1131, 0
        %v1146 = vsel %vm1138, %v1132, 0
        %v1149 = vsel %vm1138, %v1133, 0
        %v1152 = vsel %vm1138, %v1134, 0
        %v1155 = vsel %vm1138, %v1135, 0
        %v1158 = vsel %vm1138, %v1136, 0
        %v1161 = vsel %vm1138, %v1137, 0
        %1163 = vmatprep.subr.mxu0 0.0
        %1164 = vmatpush1.msra.mxu0 0.0
        %1165 = vmatprep.subr.mxu0 0.0
        %1166 = vmatpush1.msra.mxu0 0.0
        %1167 = vmatprep.subr.mxu0 0.0
        %1168 = vmatpush1.msra.mxu0 0.0
        %1169 = vmatprep.subr.mxu0 0.0
        %1170 = vmatpush1.msra.mxu0 0.0
        %1171 = vmatprep.subr.mxu0 0.0
        %1172 = vmatpush1.msra.mxu0 0.0
        %1173 = vmatprep.subr.mxu0 0.0
        %1174 = vmatpush1.msra.mxu0 0.0
        %1175 = vmatprep.subr.mxu0 0.0
        %1176 = vmatpush1.msra.mxu0 0.0
        %1177 = vmatprep.subr.mxu0 0.0
        %1178 = vmatpush1.msra.mxu0 0.0
        %1179 = vmatprep.subr.mxu0 0.0
        %1180 = vmatpush1.msra.mxu0 %v1129
        %1181 = vmatprep.subr.mxu0 0.0
        %1182 = vmatpush1.msra.mxu0 %v1128
        %1183 = vmatprep.subr.mxu0 0.0
        %1184 = vmatpush1.msra.mxu0 %v1127
        %1185 = vmatprep.subr.mxu0 0.0
        %1186 = vmatpush1.msra.mxu0 %v1126
        %1187 = vmatprep.subr.mxu0 0.0
        %1188 = vmatpush1.msra.mxu0 %v1125
        %1189 = vmatprep.subr.mxu0 0.0
        %1190 = vmatpush1.msra.mxu0 %v1124
        %1191 = vmatprep.subr.mxu0 0.0
        %1192 = vmatpush1.msra.mxu0 %v1123
        %1193 = vmatprep.subr.mxu0 0.0
        %1194 = vmatpush1.msra.mxu0 %v1122
        %1195 = vmatprep.subr.mxu0 0.0
        %1196 = vmatpush2.msra.mxu0 0.0
        %1197 = vmatprep.subr.mxu0 0.0
        %1198 = vmatpush2.msra.mxu0 0.0
        %1199 = vmatprep.subr.mxu0 0.0
        %1200 = vmatpush2.msra.mxu0 0.0
        %1201 = vmatprep.subr.mxu0 0.0
        %1202 = vmatpush2.msra.mxu0 0.0
        %1203 = vmatprep.subr.mxu0 0.0
        %1204 = vmatpush2.msra.mxu0 0.0
        %1205 = vmatprep.subr.mxu0 0.0
        %1206 = vmatpush2.msra.mxu0 0.0
        %1207 = vmatprep.subr.mxu0 0.0
        %1208 = vmatpush2.msra.mxu0 0.0
        %1209 = vmatprep.subr.mxu0 0.0
        %1210 = vmatpush2.msra.mxu0 0.0
        %1211 = vmatprep.subr.mxu0 0.0
        %1212 = vmatpush2.msra.mxu0 0.0
        %1213 = vmatprep.subr.mxu0 0.0
        %1214 = vmatpush2.msra.mxu0 0.0
        %1215 = vmatprep.subr.mxu0 0.0
        %1216 = vmatpush2.msra.mxu0 0.0
        %1217 = vmatprep.subr.mxu0 0.0
        %1218 = vmatpush2.msra.mxu0 0.0
        %1219 = vmatprep.subr.mxu0 0.0
        %1220 = vmatpush2.msra.mxu0 0.0
        %1221 = vmatprep.subr.mxu0 0.0
        %1222 = vmatpush2.msra.mxu0 0.0
        %1223 = vmatprep.subr.mxu0 0.0
        %1224 = vmatpush2.msra.mxu0 0.0
        %1225 = vmatprep.subr.mxu0 0.0
        %1226 = vmatpush2.msra.mxu0 0.0
        %1227 = vmatprep.mubr.f32.mxu0 0.0
        %1228 = vmatmul.mubr.f32.gmra.mxu0 %v1140
        %v1229 = vpop.f32.mrf.mxu0
        %v1230 = vadd.f32 0.0, %v1229
        %v1231 = vpop.f32.mrf.mxu0
        %1232 = vmatprep.mubr.f32.mxu0 0.0
        %1233 = vmatmul.mubr.f32.gmra.mxu0 %v1143
        %v1234 = vpop.f32.mrf.mxu0
        %v1235 = vadd.f32 0.0, %v1234
        %v1236 = vpop.f32.mrf.mxu0
        %1237 = vmatprep.mubr.f32.mxu0 0.0
        %1238 = vmatmul.mubr.f32.gmra.mxu0 %v1146
        %v1239 = vpop.f32.mrf.mxu0
        %v1240 = vadd.f32 0.0, %v1239
        %v1241 = vpop.f32.mrf.mxu0
        %1242 = vmatprep.mubr.f32.mxu0 0.0
        %1243 = vmatmul.mubr.f32.gmra.mxu0 %v1149
        %v1244 = vpop.f32.mrf.mxu0
        %v1245 = vadd.f32 0.0, %v1244
        %v1246 = vpop.f32.mrf.mxu0
        %1247 = vmatprep.mubr.f32.mxu0 0.0
        %1248 = vmatmul.mubr.f32.gmra.mxu0 %v1152
        %v1249 = vpop.f32.mrf.mxu0
        %v1250 = vadd.f32 0.0, %v1249
        %v1251 = vpop.f32.mrf.mxu0
        %1252 = vmatprep.mubr.f32.mxu0 0.0
        %1253 = vmatmul.mubr.f32.gmra.mxu0 %v1155
        %v1254 = vpop.f32.mrf.mxu0
        %v1255 = vadd.f32 0.0, %v1254
        %v1256 = vpop.f32.mrf.mxu0
        %1257 = vmatprep.mubr.f32.mxu0 0.0
        %1258 = vmatmul.mubr.f32.gmra.mxu0 %v1158
        %v1259 = vpop.f32.mrf.mxu0
        %v1260 = vadd.f32 0.0, %v1259
        %v1261 = vpop.f32.mrf.mxu0
        %1262 = vmatprep.mubr.f32.mxu0 0.0
        %1263 = vmatmul.mubr.f32.gmra.mxu0 %v1161
        %v1264 = vpop.f32.mrf.mxu0
        %v1265 = vadd.f32 0.0, %v1264
        %v1266 = vpop.f32.mrf.mxu0
        %1267 = vdwg.mxu0
        %v1268 = vld [vmem:[%s5] sm:$0xff]
        %v1269 = vld [vmem:[%s5 + $0x8] sm:$0xff]
        %v1270 = vld [vmem:[%s5 + $0x10] sm:$0xff]
        %v1271 = vld [vmem:[%s5 + $0x18] sm:$0xff]
        %v1272 = vld [vmem:[%s6] sm:$0x1]
        %v1274 = vlaneseq
        %v1275 = vshrl.u32 %v1274, 7
        %v1276 = vsub.s32 0, %v1275
        %v1277 = vrot.slane %v1272, %v1276
        %v1280 = vsel %vm992, %v1230, 0
        %v1283 = vsel %vm992, %v1235, 0
        %v1286 = vsel %vm992, %v1240, 0
        %v1289 = vsel %vm992, %v1245, 0
        %v1292 = vsel %vm992, %v1250, 0
        %v1295 = vsel %vm992, %v1255, 0
        %v1298 = vsel %vm992, %v1260, 0
        %v1301 = vsel %vm992, %v1265, 0
        %1303 = vmatprep.subr.mxu0 0.0
        %1304 = vmatpush1.msra.mxu0 0.0
        %1305 = vmatprep.subr.mxu0 0.0
        %1306 = vmatpush1.msra.mxu0 0.0
        %1307 = vmatprep.subr.mxu0 0.0
        %1308 = vmatpush1.msra.mxu0 0.0
        %1309 = vmatprep.subr.mxu0 0.0
        %1310 = vmatpush1.msra.mxu0 0.0
        %1311 = vmatprep.subr.mxu0 0.0
        %1312 = vmatpush1.msra.mxu0 0.0
        %1313 = vmatprep.subr.mxu0 0.0
        %1314 = vmatpush1.msra.mxu0 0.0
        %1315 = vmatprep.subr.mxu0 0.0
        %1316 = vmatpush1.msra.mxu0 0.0
        %1317 = vmatprep.subr.mxu0 0.0
        %1318 = vmatpush1.msra.mxu0 0.0
        %1319 = vmatprep.subr.mxu0 0.0
        %1320 = vmatpush1.msra.mxu0 0.0
        %1321 = vmatprep.subr.mxu0 0.0
        %1322 = vmatpush1.msra.mxu0 0.0
        %1323 = vmatprep.subr.mxu0 0.0
        %1324 = vmatpush1.msra.mxu0 0.0
        %1325 = vmatprep.subr.mxu0 0.0
        %1326 = vmatpush1.msra.mxu0 0.0
        %1327 = vmatprep.subr.mxu0 0.0
        %1328 = vmatpush1.msra.mxu0 %v1271
        %1329 = vmatprep.subr.mxu0 0.0
        %1330 = vmatpush1.msra.mxu0 %v1270
        %1331 = vmatprep.subr.mxu0 0.0
        %1332 = vmatpush1.msra.mxu0 %v1269
        %1333 = vmatprep.subr.mxu0 0.0
        %1334 = vmatpush1.msra.mxu0 %v1268
        %1335 = vmatprep.subr.mxu0 0.0
        %1336 = vmatpush2.msra.mxu0 0.0
        %1337 = vmatprep.subr.mxu0 0.0
        %1338 = vmatpush2.msra.mxu0 0.0
        %1339 = vmatprep.subr.mxu0 0.0
        %1340 = vmatpush2.msra.mxu0 0.0
        %1341 = vmatprep.subr.mxu0 0.0
        %1342 = vmatpush2.msra.mxu0 0.0
        %1343 = vmatprep.subr.mxu0 0.0
        %1344 = vmatpush2.msra.mxu0 0.0
        %1345 = vmatprep.subr.mxu0 0.0
        %1346 = vmatpush2.msra.mxu0 0.0
        %1347 = vmatprep.subr.mxu0 0.0
        %1348 = vmatpush2.msra.mxu0 0.0
        %1349 = vmatprep.subr.mxu0 0.0
        %1350 = vmatpush2.msra.mxu0 0.0
        %1351 = vmatprep.subr.mxu0 0.0
        %1352 = vmatpush2.msra.mxu0 0.0
        %1353 = vmatprep.subr.mxu0 0.0
        %1354 = vmatpush2.msra.mxu0 0.0
        %1355 = vmatprep.subr.mxu0 0.0
        %1356 = vmatpush2.msra.mxu0 0.0
        %1357 = vmatprep.subr.mxu0 0.0
        %1358 = vmatpush2.msra.mxu0 0.0
        %1359 = vmatprep.subr.mxu0 0.0
        %1360 = vmatpush2.msra.mxu0 0.0
        %1361 = vmatprep.subr.mxu0 0.0
        %1362 = vmatpush2.msra.mxu0 0.0
        %1363 = vmatprep.subr.mxu0 0.0
        %1364 = vmatpush2.msra.mxu0 0.0
        %1365 = vmatprep.subr.mxu0 0.0
        %1366 = vmatpush2.msra.mxu0 0.0
        %1367 = vmatprep.mubr.f32.mxu0 0.0
        %1368 = vmatmul.mubr.f32.gmra.mxu0 %v1280
        %v1369 = vpop.f32.mrf.mxu0
        %v1370 = vadd.f32 %v1277, %v1369
        %v1371 = vpop.f32.mrf.mxu0
        %1372 = vmatprep.mubr.f32.mxu0 0.0
        %1373 = vmatmul.mubr.f32.gmra.mxu0 %v1283
        %v1374 = vpop.f32.mrf.mxu0
        %v1375 = vadd.f32 %v1277, %v1374
        %v1376 = vpop.f32.mrf.mxu0
        %1377 = vmatprep.mubr.f32.mxu0 0.0
        %1378 = vmatmul.mubr.f32.gmra.mxu0 %v1286
        %v1379 = vpop.f32.mrf.mxu0
        %v1380 = vadd.f32 %v1277, %v1379
        %v1381 = vpop.f32.mrf.mxu0
        %1382 = vmatprep.mubr.f32.mxu0 0.0
        %1383 = vmatmul.mubr.f32.gmra.mxu0 %v1289
        %v1384 = vpop.f32.mrf.mxu0
        %v1385 = vadd.f32 %v1277, %v1384
        %v1386 = vpop.f32.mrf.mxu0
        %1387 = vmatprep.mubr.f32.mxu0 0.0
        %1388 = vmatmul.mubr.f32.gmra.mxu0 %v1292
        %v1389 = vpop.f32.mrf.mxu0
        %v1390 = vadd.f32 %v1277, %v1389
        %v1391 = vpop.f32.mrf.mxu0
        %1392 = vmatprep.mubr.f32.mxu0 0.0
        %1393 = vmatmul.mubr.f32.gmra.mxu0 %v1295
        %v1394 = vpop.f32.mrf.mxu0
        %v1395 = vadd.f32 %v1277, %v1394
        %v1396 = vpop.f32.mrf.mxu0
        %1397 = vmatprep.mubr.f32.mxu0 0.0
        %1398 = vmatmul.mubr.f32.gmra.mxu0 %v1298
        %v1399 = vpop.f32.mrf.mxu0
        %v1400 = vadd.f32 %v1277, %v1399
        %v1401 = vpop.f32.mrf.mxu0
        %1402 = vmatprep.mubr.f32.mxu0 0.0
        %1403 = vmatmul.mubr.f32.gmra.mxu0 %v1301
        %v1404 = vpop.f32.mrf.mxu0
        %v1405 = vadd.f32 %v1277, %v1404
        %v1406 = vpop.f32.mrf.mxu0
        %1407 = vdwg.mxu0
        %v1408 = vmax.f32 %v1370, 0.0
        %v1409 = vmax.f32 %v1375, 0.0
        %v1410 = vmax.f32 %v1380, 0.0
        %v1411 = vmax.f32 %v1385, 0.0
        %v1412 = vmax.f32 %v1390, 0.0
        %v1413 = vmax.f32 %v1395, 0.0
        %v1414 = vmax.f32 %v1400, 0.0
        %v1415 = vmax.f32 %v1405, 0.0
        %v1416 = vld [vmem:[%s7] sm:$0xff]
        %v1417 = vld [vmem:[%s7 + $0x8] sm:$0xff]
        %v1418 = vld [vmem:[%s7 + $0x10] sm:$0xff]
        %v1419 = vld [vmem:[%s7 + $0x18] sm:$0xff]
        %v1421 = vsel %vm992, %v1408, 0
        %v1424 = vsel %vm992, %v1409, 0
        %v1427 = vsel %vm992, %v1410, 0
        %v1430 = vsel %vm992, %v1411, 0
        %v1433 = vsel %vm992, %v1412, 0
        %v1436 = vsel %vm992, %v1413, 0
        %v1439 = vsel %vm992, %v1414, 0
        %v1442 = vsel %vm992, %v1415, 0
        %1444 = vmatprep.subr.mxu0 0.0
        %1445 = vmatpush1.msra.mxu0 0.0
        %1446 = vmatprep.subr.mxu0 0.0
        %1447 = vmatpush1.msra.mxu0 0.0
        %1448 = vmatprep.subr.mxu0 0.0
        %1449 = vmatpush1.msra.mxu0 0.0
        %1450 = vmatprep.subr.mxu0 0.0
        %1451 = vmatpush1.msra.mxu0 0.0
        %1452 = vmatprep.subr.mxu0 0.0
        %1453 = vmatpush1.msra.mxu0 0.0
        %1454 = vmatprep.subr.mxu0 0.0
        %1455 = vmatpush1.msra.mxu0 0.0
        %1456 = vmatprep.subr.mxu0 0.0
        %1457 = vmatpush1.msra.mxu0 0.0
        %1458 = vmatprep.subr.mxu0 0.0
        %1459 = vmatpush1.msra.mxu0 0.0
        %1460 = vmatprep.subr.mxu0 0.0
        %1461 = vmatpush1.msra.mxu0 0.0
        %1462 = vmatprep.subr.mxu0 0.0
        %1463 = vmatpush1.msra.mxu0 0.0
        %1464 = vmatprep.subr.mxu0 0.0
        %1465 = vmatpush1.msra.mxu0 0.0
        %1466 = vmatprep.subr.mxu0 0.0
        %1467 = vmatpush1.msra.mxu0 0.0
        %1468 = vmatprep.subr.mxu0 0.0
        %1469 = vmatpush1.msra.mxu0 %v1419
        %1470 = vmatprep.subr.mxu0 0.0
        %1471 = vmatpush1.msra.mxu0 %v1418
        %1472 = vmatprep.subr.mxu0 0.0
        %1473 = vmatpush1.msra.mxu0 %v1417
        %1474 = vmatprep.subr.mxu0 0.0
        %1475 = vmatpush1.msra.mxu0 %v1416
        %1476 = vmatprep.subr.mxu0 0.0
        %1477 = vmatpush2.msra.mxu0 0.0
        %1478 = vmatprep.subr.mxu0 0.0
        %1479 = vmatpush2.msra.mxu0 0.0
        %1480 = vmatprep.subr.mxu0 0.0
        %1481 = vmatpush2.msra.mxu0 0.0
        %1482 = vmatprep.subr.mxu0 0.0
        %1483 = vmatpush2.msra.mxu0 0.0
        %1484 = vmatprep.subr.mxu0 0.0
        %1485 = vmatpush2.msra.mxu0 0.0
        %1486 = vmatprep.subr.mxu0 0.0
        %1487 = vmatpush2.msra.mxu0 0.0
        %1488 = vmatprep.subr.mxu0 0.0
        %1489 = vmatpush2.msra.mxu0 0.0
        %1490 = vmatprep.subr.mxu0 0.0
        %1491 = vmatpush2.msra.mxu0 0.0
        %1492 = vmatprep.subr.mxu0 0.0
        %1493 = vmatpush2.msra.mxu0 0.0
        %1494 = vmatprep.subr.mxu0 0.0
        %1495 = vmatpush2.msra.mxu0 0.0
        %1496 = vmatprep.subr.mxu0 0.0
        %1497 = vmatpush2.msra.mxu0 0.0
        %1498 = vmatprep.subr.mxu0 0.0
        %1499 = vmatpush2.msra.mxu0 0.0
        %1500 = vmatprep.subr.mxu0 0.0
        %1501 = vmatpush2.msra.mxu0 0.0
        %1502 = vmatprep.subr.mxu0 0.0
        %1503 = vmatpush2.msra.mxu0 0.0
        %1504 = vmatprep.subr.mxu0 0.0
        %1505 = vmatpush2.msra.mxu0 0.0
        %1506 = vmatprep.subr.mxu0 0.0
        %1507 = vmatpush2.msra.mxu0 0.0
        %1508 = vmatprep.mubr.f32.mxu0 0.0
        %1509 = vmatmul.mubr.f32.gmra.mxu0 %v1421
        %v1510 = vpop.f32.mrf.mxu0
        %v1511 = vadd.f32 0.0, %v1510
        %v1512 = vpop.f32.mrf.mxu0
        %1513 = vmatprep.mubr.f32.mxu0 0.0
        %1514 = vmatmul.mubr.f32.gmra.mxu0 %v1424
        %v1515 = vpop.f32.mrf.mxu0
        %v1516 = vadd.f32 0.0, %v1515
        %v1517 = vpop.f32.mrf.mxu0
        %1518 = vmatprep.mubr.f32.mxu0 0.0
        %1519 = vmatmul.mubr.f32.gmra.mxu0 %v1427
        %v1520 = vpop.f32.mrf.mxu0
        %v1521 = vadd.f32 0.0, %v1520
        %v1522 = vpop.f32.mrf.mxu0
        %1523 = vmatprep.mubr.f32.mxu0 0.0
        %1524 = vmatmul.mubr.f32.gmra.mxu0 %v1430
        %v1525 = vpop.f32.mrf.mxu0
        %v1526 = vadd.f32 0.0, %v1525
        %v1527 = vpop.f32.mrf.mxu0
        %1528 = vmatprep.mubr.f32.mxu0 0.0
        %1529 = vmatmul.mubr.f32.gmra.mxu0 %v1433
        %v1530 = vpop.f32.mrf.mxu0
        %v1531 = vadd.f32 0.0, %v1530
        %v1532 = vpop.f32.mrf.mxu0
        %1533 = vmatprep.mubr.f32.mxu0 0.0
        %1534 = vmatmul.mubr.f32.gmra.mxu0 %v1436
        %v1535 = vpop.f32.mrf.mxu0
        %v1536 = vadd.f32 0.0, %v1535
        %v1537 = vpop.f32.mrf.mxu0
        %1538 = vmatprep.mubr.f32.mxu0 0.0
        %1539 = vmatmul.mubr.f32.gmra.mxu0 %v1439
        %v1540 = vpop.f32.mrf.mxu0
        %v1541 = vadd.f32 0.0, %v1540
        %v1542 = vpop.f32.mrf.mxu0
        %1543 = vmatprep.mubr.f32.mxu0 0.0
        %1544 = vmatmul.mubr.f32.gmra.mxu0 %v1442
        %v1545 = vpop.f32.mrf.mxu0
        %v1546 = vadd.f32 0.0, %v1545
        %v1547 = vpop.f32.mrf.mxu0
        %1548 = vdwg.mxu0
        %v1549 = vadd.f32 %v665, %v666
        %1550 = vadd.xlane.f32.xlu0 %v1549
        %v1551 = vpop.xlane.xlu0 %1550
        %v1552 = vadd.f32 %v667, %v668
        %1553 = vadd.xlane.f32.xlu0 %v1552
        %v1554 = vpop.xlane.xlu0 %1553
        %v1555 = vadd.f32 %v669, %v670
        %1556 = vadd.xlane.f32.xlu0 %v1555
        %v1557 = vpop.xlane.xlu0 %1556
        %v1558 = vadd.f32 %v671, %v672
        %1559 = vadd.xlane.f32.xlu0 %v1558
        %v1560 = vpop.xlane.xlu0 %1559
        %v1561 = vadd.f32 %v673, %v674
        %1562 = vadd.xlane.f32.xlu0 %v1561
        %v1563 = vpop.xlane.xlu0 %1562
        %v1564 = vadd.f32 %v675, %v676
        %1565 = vadd.xlane.f32.xlu0 %v1564
        %v1566 = vpop.xlane.xlu0 %1565
        %v1567 = vadd.f32 %v677, %v678
        %1568 = vadd.xlane.f32.xlu0 %v1567
        %v1569 = vpop.xlane.xlu0 %1568
        %v1570 = vadd.f32 %v679, %v680
        %1571 = vadd.xlane.f32.xlu0 %v1570
        %v1572 = vpop.xlane.xlu0 %1571
        %v1573 = vmul.f32 %v1551, %v1511
        %v1574 = vmul.f32 %v1554, %v1516
        %v1575 = vmul.f32 %v1557, %v1521
        %v1576 = vmul.f32 %v1560, %v1526
        %v1577 = vmul.f32 %v1563, %v1531
        %v1578 = vmul.f32 %v1566, %v1536
        %v1579 = vmul.f32 %v1569, %v1541
        %v1580 = vmul.f32 %v1572, %v1546
        %v1581 = vsel %vm992, %v1573, 0.0
        %v1582 = vsel %vm992, %v1574, 0.0
        %v1583 = vadd.f32 %v1581, %v1582
        %v1584 = vsel %vm992, %v1575, 0.0
        %v1585 = vadd.f32 %v1583, %v1584
        %v1586 = vsel %vm992, %v1576, 0.0
        %v1587 = vadd.f32 %v1585, %v1586
        %v1588 = vsel %vm992, %v1577, 0.0
        %v1589 = vadd.f32 %v1587, %v1588
        %v1590 = vsel %vm992, %v1578, 0.0
        %v1591 = vadd.f32 %v1589, %v1590
        %v1592 = vsel %vm992, %v1579, 0.0
        %v1593 = vadd.f32 %v1591, %v1592
        %v1594 = vsel %vm992, %v1580, 0.0
        %v1595 = vadd.f32 %v1593, %v1594
        %v1596 = vrot.slane %v1595, 4
        %v1597 = vadd.f32 %v1595, %v1596
        %v1598 = vrot.slane %v1597, 2
        %v1599 = vadd.f32 %v1597, %v1598
        %v1600 = vrot.slane %v1599, 1
        %v1601 = vadd.f32 %v1599, %v1600
        %v1602 = vsel %vm992, %v425, 0.0
        %v1603 = vsel %vm992, %v426, 0.0
        %v1604 = vadd.f32 %v1602, %v1603
        %v1605 = vsel %vm992, %v427, 0.0
        %v1606 = vadd.f32 %v1604, %v1605
        %v1607 = vsel %vm992, %v428, 0.0
        %v1608 = vadd.f32 %v1606, %v1607
        %v1609 = vsel %vm992, %v429, 0.0
        %v1610 = vadd.f32 %v1608, %v1609
        %v1611 = vsel %vm992, %v430, 0.0
        %v1612 = vadd.f32 %v1610, %v1611
        %v1613 = vsel %vm992, %v431, 0.0
        %v1614 = vadd.f32 %v1612, %v1613
        %v1615 = vsel %vm992, %v432, 0.0
        %v1616 = vadd.f32 %v1614, %v1615
        %v1617 = vsel %vm992, %v433, 0.0
        %v1618 = vadd.f32 %v1616, %v1617
        %v1619 = vsel %vm992, %v434, 0.0
        %v1620 = vadd.f32 %v1618, %v1619
        %v1621 = vsel %vm992, %v435, 0.0
        %v1622 = vadd.f32 %v1620, %v1621
        %v1623 = vsel %vm992, %v436, 0.0
        %v1624 = vadd.f32 %v1622, %v1623
        %v1625 = vsel %vm992, %v437, 0.0
        %v1626 = vadd.f32 %v1624, %v1625
        %v1627 = vsel %vm992, %v438, 0.0
        %v1628 = vadd.f32 %v1626, %v1627
        %v1629 = vsel %vm992, %v439, 0.0
        %v1630 = vadd.f32 %v1628, %v1629
        %v1631 = vsel %vm992, %v440, 0.0
        %v1632 = vadd.f32 %v1630, %v1631
        %v1633 = vsel %vm992, %v457, 0.0
        %v1634 = vadd.f32 %v1632, %v1633
        %v1635 = vsel %vm992, %v458, 0.0
        %v1636 = vadd.f32 %v1634, %v1635
        %v1637 = vsel %vm992, %v459, 0.0
        %v1638 = vadd.f32 %v1636, %v1637
        %v1639 = vsel %vm992, %v460, 0.0
        %v1640 = vadd.f32 %v1638, %v1639
        %v1641 = vsel %vm992, %v461, 0.0
        %v1642 = vadd.f32 %v1640, %v1641
        %v1643 = vsel %vm992, %v462, 0.0
        %v1644 = vadd.f32 %v1642, %v1643
        %v1645 = vsel %vm992, %v463, 0.0
        %v1646 = vadd.f32 %v1644, %v1645
        %v1647 = vsel %vm992, %v464, 0.0
        %v1648 = vadd.f32 %v1646, %v1647
        %v1649 = vsel %vm992, %v465, 0.0
        %v1650 = vadd.f32 %v1648, %v1649
        %v1651 = vsel %vm992, %v466, 0.0
        %v1652 = vadd.f32 %v1650, %v1651
        %v1653 = vsel %vm992, %v467, 0.0
        %v1654 = vadd.f32 %v1652, %v1653
        %v1655 = vsel %vm992, %v468, 0.0
        %v1656 = vadd.f32 %v1654, %v1655
        %v1657 = vsel %vm992, %v469, 0.0
        %v1658 = vadd.f32 %v1656, %v1657
        %v1659 = vsel %vm992, %v470, 0.0
        %v1660 = vadd.f32 %v1658, %v1659
        %v1661 = vsel %vm992, %v471, 0.0
        %v1662 = vadd.f32 %v1660, %v1661
        %v1663 = vsel %vm992, %v472, 0.0
        %v1664 = vadd.f32 %v1662, %v1663
        %v1665 = vsel %vm992, %v489, 0.0
        %v1666 = vadd.f32 %v1664, %v1665
        %v1667 = vsel %vm992, %v490, 0.0
        %v1668 = vadd.f32 %v1666, %v1667
        %v1669 = vsel %vm992, %v491, 0.0
        %v1670 = vadd.f32 %v1668, %v1669
        %v1671 = vsel %vm992, %v492, 0.0
        %v1672 = vadd.f32 %v1670, %v1671
        %v1673 = vsel %vm992, %v493, 0.0
        %v1674 = vadd.f32 %v1672, %v1673
        %v1675 = vsel %vm992, %v494, 0.0
        %v1676 = vadd.f32 %v1674, %v1675
        %v1677 = vsel %vm992, %v495, 0.0
        %v1678 = vadd.f32 %v1676, %v1677
        %v1679 = vsel %vm992, %v496, 0.0
        %v1680 = vadd.f32 %v1678, %v1679
        %v1681 = vsel %vm992, %v497, 0.0
        %v1682 = vadd.f32 %v1680, %v1681
        %v1683 = vsel %vm992, %v498, 0.0
        %v1684 = vadd.f32 %v1682, %v1683
        %v1685 = vsel %vm992, %v499, 0.0
        %v1686 = vadd.f32 %v1684, %v1685
        %v1687 = vsel %vm992, %v500, 0.0
        %v1688 = vadd.f32 %v1686, %v1687
        %v1689 = vsel %vm992, %v501, 0.0
        %v1690 = vadd.f32 %v1688, %v1689
        %v1691 = vsel %vm992, %v502, 0.0
        %v1692 = vadd.f32 %v1690, %v1691
        %v1693 = vsel %vm992, %v503, 0.0
        %v1694 = vadd.f32 %v1692, %v1693
        %v1695 = vsel %vm992, %v504, 0.0
        %v1696 = vadd.f32 %v1694, %v1695
        %v1697 = vsel %vm992, %v521, 0.0
        %v1698 = vadd.f32 %v1696, %v1697
        %v1699 = vsel %vm992, %v522, 0.0
        %v1700 = vadd.f32 %v1698, %v1699
        %v1701 = vsel %vm992, %v523, 0.0
        %v1702 = vadd.f32 %v1700, %v1701
        %v1703 = vsel %vm992, %v524, 0.0
        %v1704 = vadd.f32 %v1702, %v1703
        %v1705 = vsel %vm992, %v525, 0.0
        %v1706 = vadd.f32 %v1704, %v1705
        %v1707 = vsel %vm992, %v526, 0.0
        %v1708 = vadd.f32 %v1706, %v1707
        %v1709 = vsel %vm992, %v527, 0.0
        %v1710 = vadd.f32 %v1708, %v1709
        %v1711 = vsel %vm992, %v528, 0.0
        %v1712 = vadd.f32 %v1710, %v1711
        %v1713 = vsel %vm992, %v529, 0.0
        %v1714 = vadd.f32 %v1712, %v1713
        %v1715 = vsel %vm992, %v530, 0.0
        %v1716 = vadd.f32 %v1714, %v1715
        %v1717 = vsel %vm992, %v531, 0.0
        %v1718 = vadd.f32 %v1716, %v1717
        %v1719 = vsel %vm992, %v532, 0.0
        %v1720 = vadd.f32 %v1718, %v1719
        %v1721 = vsel %vm992, %v533, 0.0
        %v1722 = vadd.f32 %v1720, %v1721
        %v1723 = vsel %vm992, %v534, 0.0
        %v1724 = vadd.f32 %v1722, %v1723
        %v1725 = vsel %vm992, %v535, 0.0
        %v1726 = vadd.f32 %v1724, %v1725
        %v1727 = vsel %vm992, %v536, 0.0
        %v1728 = vadd.f32 %v1726, %v1727
        %v1729 = vsel %vm992, %v553, 0.0
        %v1730 = vadd.f32 %v1728, %v1729
        %v1731 = vsel %vm992, %v554, 0.0
        %v1732 = vadd.f32 %v1730, %v1731
        %v1733 = vsel %vm992, %v555, 0.0
        %v1734 = vadd.f32 %v1732, %v1733
        %v1735 = vsel %vm992, %v556, 0.0
        %v1736 = vadd.f32 %v1734, %v1735
        %v1737 = vsel %vm992, %v557, 0.0
        %v1738 = vadd.f32 %v1736, %v1737
        %v1739 = vsel %vm992, %v558, 0.0
        %v1740 = vadd.f32 %v1738, %v1739
        %v1741 = vsel %vm992, %v559, 0.0
        %v1742 = vadd.f32 %v1740, %v1741
        %v1743 = vsel %vm992, %v560, 0.0
        %v1744 = vadd.f32 %v1742, %v1743
        %v1745 = vsel %vm992, %v561, 0.0
        %v1746 = vadd.f32 %v1744, %v1745
        %v1747 = vsel %vm992, %v562, 0.0
        %v1748 = vadd.f32 %v1746, %v1747
        %v1749 = vsel %vm992, %v563, 0.0
        %v1750 = vadd.f32 %v1748, %v1749
        %v1751 = vsel %vm992, %v564, 0.0
        %v1752 = vadd.f32 %v1750, %v1751
        %v1753 = vsel %vm992, %v565, 0.0
        %v1754 = vadd.f32 %v1752, %v1753
        %v1755 = vsel %vm992, %v566, 0.0
        %v1756 = vadd.f32 %v1754, %v1755
        %v1757 = vsel %vm992, %v567, 0.0
        %v1758 = vadd.f32 %v1756, %v1757
        %v1759 = vsel %vm992, %v568, 0.0
        %v1760 = vadd.f32 %v1758, %v1759
        %v1761 = vsel %vm992, %v585, 0.0
        %v1762 = vadd.f32 %v1760, %v1761
        %v1763 = vsel %vm992, %v586, 0.0
        %v1764 = vadd.f32 %v1762, %v1763
        %v1765 = vsel %vm992, %v587, 0.0
        %v1766 = vadd.f32 %v1764, %v1765
        %v1767 = vsel %vm992, %v588, 0.0
        %v1768 = vadd.f32 %v1766, %v1767
        %v1769 = vsel %vm992, %v589, 0.0
        %v1770 = vadd.f32 %v1768, %v1769
        %v1771 = vsel %vm992, %v590, 0.0
        %v1772 = vadd.f32 %v1770, %v1771
        %v1773 = vsel %vm992, %v591, 0.0
        %v1774 = vadd.f32 %v1772, %v1773
        %v1775 = vsel %vm992, %v592, 0.0
        %v1776 = vadd.f32 %v1774, %v1775
        %v1777 = vsel %vm992, %v593, 0.0
        %v1778 = vadd.f32 %v1776, %v1777
        %v1779 = vsel %vm992, %v594, 0.0
        %v1780 = vadd.f32 %v1778, %v1779
        %v1781 = vsel %vm992, %v595, 0.0
        %v1782 = vadd.f32 %v1780, %v1781
        %v1783 = vsel %vm992, %v596, 0.0
        %v1784 = vadd.f32 %v1782, %v1783
        %v1785 = vsel %vm992, %v597, 0.0
        %v1786 = vadd.f32 %v1784, %v1785
        %v1787 = vsel %vm992, %v598, 0.0
        %v1788 = vadd.f32 %v1786, %v1787
        %v1789 = vsel %vm992, %v599, 0.0
        %v1790 = vadd.f32 %v1788, %v1789
        %v1791 = vsel %vm992, %v600, 0.0
        %v1792 = vadd.f32 %v1790, %v1791
        %v1793 = vsel %vm992, %v617, 0.0
        %v1794 = vadd.f32 %v1792, %v1793
        %v1795 = vsel %vm992, %v618, 0.0
        %v1796 = vadd.f32 %v1794, %v1795
        %v1797 = vsel %vm992, %v619, 0.0
        %v1798 = vadd.f32 %v1796, %v1797
        %v1799 = vsel %vm992, %v620, 0.0
        %v1800 = vadd.f32 %v1798, %v1799
        %v1801 = vsel %vm992, %v621, 0.0
        %v1802 = vadd.f32 %v1800, %v1801
        %v1803 = vsel %vm992, %v622, 0.0
        %v1804 = vadd.f32 %v1802, %v1803
        %v1805 = vsel %vm992, %v623, 0.0
        %v1806 = vadd.f32 %v1804, %v1805
        %v1807 = vsel %vm992, %v624, 0.0
        %v1808 = vadd.f32 %v1806, %v1807
        %v1809 = vsel %vm992, %v625, 0.0
        %v1810 = vadd.f32 %v1808, %v1809
        %v1811 = vsel %vm992, %v626, 0.0
        %v1812 = vadd.f32 %v1810, %v1811
        %v1813 = vsel %vm992, %v627, 0.0
        %v1814 = vadd.f32 %v1812, %v1813
        %v1815 = vsel %vm992, %v628, 0.0
        %v1816 = vadd.f32 %v1814, %v1815
        %v1817 = vsel %vm992, %v629, 0.0
        %v1818 = vadd.f32 %v1816, %v1817
        %v1819 = vsel %vm992, %v630, 0.0
        %v1820 = vadd.f32 %v1818, %v1819
        %v1821 = vsel %vm992, %v631, 0.0
        %v1822 = vadd.f32 %v1820, %v1821
        %v1823 = vsel %vm992, %v632, 0.0
        %v1824 = vadd.f32 %v1822, %v1823
        %v1825 = vsel %vm992, %v649, 0.0
        %v1826 = vadd.f32 %v1824, %v1825
        %v1827 = vsel %vm992, %v650, 0.0
        %v1828 = vadd.f32 %v1826, %v1827
        %v1829 = vsel %vm992, %v651, 0.0
        %v1830 = vadd.f32 %v1828, %v1829
        %v1831 = vsel %vm992, %v652, 0.0
        %v1832 = vadd.f32 %v1830, %v1831
        %v1833 = vsel %vm992, %v653, 0.0
        %v1834 = vadd.f32 %v1832, %v1833
        %v1835 = vsel %vm992, %v654, 0.0
        %v1836 = vadd.f32 %v1834, %v1835
        %v1837 = vsel %vm992, %v655, 0.0
        %v1838 = vadd.f32 %v1836, %v1837
        %v1839 = vsel %vm992, %v656, 0.0
        %v1840 = vadd.f32 %v1838, %v1839
        %v1841 = vsel %vm992, %v657, 0.0
        %v1842 = vadd.f32 %v1840, %v1841
        %v1843 = vsel %vm992, %v658, 0.0
        %v1844 = vadd.f32 %v1842, %v1843
        %v1845 = vsel %vm992, %v659, 0.0
        %v1846 = vadd.f32 %v1844, %v1845
        %v1847 = vsel %vm992, %v660, 0.0
        %v1848 = vadd.f32 %v1846, %v1847
        %v1849 = vsel %vm992, %v661, 0.0
        %v1850 = vadd.f32 %v1848, %v1849
        %v1851 = vsel %vm992, %v662, 0.0
        %v1852 = vadd.f32 %v1850, %v1851
        %v1853 = vsel %vm992, %v663, 0.0
        %v1854 = vadd.f32 %v1852, %v1853
        %v1855 = vsel %vm992, %v664, 0.0
        %v1856 = vadd.f32 %v1854, %v1855
        %v1857 = vrot.slane %v1856, 4
        %v1858 = vadd.f32 %v1856, %v1857
        %v1859 = vrot.slane %v1858, 2
        %v1860 = vadd.f32 %v1858, %v1859
        %v1861 = vrot.slane %v1860, 1
        %v1862 = vadd.f32 %v1860, %v1861
        %v1863 = vadd.f32 %v1862, %v1601
        %v1864 = vmul.f32 %v1863, 0.0009765625
        %v1865 = vld [vmem:[%s8] sm:$0xff]
        %v1866 = vld [vmem:[%s8 + $0x8] sm:$0xff]
        %v1867 = vld [vmem:[%s8 + $0x10] sm:$0xff]
        %v1868 = vld [vmem:[%s8 + $0x18] sm:$0xff]
        %v1869 = vld [vmem:[%s9] sm:$0x1]
        %v1871 = vsel %vm992, %v1864, 0
        %1873 = vmatprep.subr.mxu0 0.0
        %1874 = vmatpush1.msra.mxu0 0.0
        %1875 = vmatprep.subr.mxu0 0.0
        %1876 = vmatpush1.msra.mxu0 0.0
        %1877 = vmatprep.subr.mxu0 0.0
        %1878 = vmatpush1.msra.mxu0 0.0
        %1879 = vmatprep.subr.mxu0 0.0
        %1880 = vmatpush1.msra.mxu0 0.0
        %1881 = vmatprep.subr.mxu0 0.0
        %1882 = vmatpush1.msra.mxu0 0.0
        %1883 = vmatprep.subr.mxu0 0.0
        %1884 = vmatpush1.msra.mxu0 0.0
        %1885 = vmatprep.subr.mxu0 0.0
        %1886 = vmatpush1.msra.mxu0 0.0
        %1887 = vmatprep.subr.mxu0 0.0
        %1888 = vmatpush1.msra.mxu0 0.0
        %1889 = vmatprep.subr.mxu0 0.0
        %1890 = vmatpush1.msra.mxu0 0.0
        %1891 = vmatprep.subr.mxu0 0.0
        %1892 = vmatpush1.msra.mxu0 0.0
        %1893 = vmatprep.subr.mxu0 0.0
        %1894 = vmatpush1.msra.mxu0 0.0
        %1895 = vmatprep.subr.mxu0 0.0
        %1896 = vmatpush1.msra.mxu0 0.0
        %1897 = vmatprep.subr.mxu0 0.0
        %1898 = vmatpush1.msra.mxu0 %v1868
        %1899 = vmatprep.subr.mxu0 0.0
        %1900 = vmatpush1.msra.mxu0 %v1867
        %1901 = vmatprep.subr.mxu0 0.0
        %1902 = vmatpush1.msra.mxu0 %v1866
        %1903 = vmatprep.subr.mxu0 0.0
        %1904 = vmatpush1.msra.mxu0 %v1865
        %1905 = vmatprep.subr.mxu0 0.0
        %1906 = vmatpush2.msra.mxu0 0.0
        %1907 = vmatprep.subr.mxu0 0.0
        %1908 = vmatpush2.msra.mxu0 0.0
        %1909 = vmatprep.subr.mxu0 0.0
        %1910 = vmatpush2.msra.mxu0 0.0
        %1911 = vmatprep.subr.mxu0 0.0
        %1912 = vmatpush2.msra.mxu0 0.0
        %1913 = vmatprep.subr.mxu0 0.0
        %1914 = vmatpush2.msra.mxu0 0.0
        %1915 = vmatprep.subr.mxu0 0.0
        %1916 = vmatpush2.msra.mxu0 0.0
        %1917 = vmatprep.subr.mxu0 0.0
        %1918 = vmatpush2.msra.mxu0 0.0
        %1919 = vmatprep.subr.mxu0 0.0
        %1920 = vmatpush2.msra.mxu0 0.0
        %1921 = vmatprep.subr.mxu0 0.0
        %1922 = vmatpush2.msra.mxu0 0.0
        %1923 = vmatprep.subr.mxu0 0.0
        %1924 = vmatpush2.msra.mxu0 0.0
        %1925 = vmatprep.subr.mxu0 0.0
        %1926 = vmatpush2.msra.mxu0 0.0
        %1927 = vmatprep.subr.mxu0 0.0
        %1928 = vmatpush2.msra.mxu0 0.0
        %1929 = vmatprep.subr.mxu0 0.0
        %1930 = vmatpush2.msra.mxu0 0.0
        %1931 = vmatprep.subr.mxu0 0.0
        %1932 = vmatpush2.msra.mxu0 0.0
        %1933 = vmatprep.subr.mxu0 0.0
        %1934 = vmatpush2.msra.mxu0 0.0
        %1935 = vmatprep.subr.mxu0 0.0
        %1936 = vmatpush2.msra.mxu0 0.0
        %1937 = vmatprep.mubr.f32.mxu0 0.0
        %1938 = vmatmul.mubr.f32.gmra.mxu0 %v1871
        %v1939 = vpop.f32.mrf.mxu0
        %v1940 = vadd.f32 %v1869, %v1939
        %v1941 = vpop.f32.mrf.mxu0
        %1942 = vdwg.mxu0
        %vm1943 = vcmask 73728
        %1944 = vst.msk [vmem:[%s366] sm:$0x1] %vm1943, %v1940
        %s1945 = sand.u32 %s252, 1
        %s1946 = scalar_lea.sflag [#allocation3], %s1945
        %s1947 = sand.u32 %s252, 1
        %s1948 = scalar_lea.vmem [#allocation2], %s1947
        // Predicated region
        $region61: #{space_time_model.1} parent=59 // pred_check
          %p1949 = pneg %p262
        $region62: #{space_time_model.1} parent=59 // pred_check_branch
          %1951 = sbr.rel (%p1949) target = $region64
        $region63: #{space_time_model.1} parent=59 // pred_region
          %s1953 = ssub.s32 16, 16
          %1954 = vsyncadd %s1946, %s1953
          %s1955 = smul.addr %s24, 16
          %s1956 = scalar_lea.hbm %s10, %s1955
          %s1958 = sshll.u32 %s1948, 4
          %s1959 = int_to_ptr.vmem [resolvable:$true] %s1958
          %1961 = dma.vmem_to_hbm [thread:$0]  %s1959, 16, %s1956, %s1946
        $region64: #{space_time_model.1} parent=59 // pred_fallthru
          _
      $region60: #{space_time_model.1} parent=5 // pred_fallthru
        _
      %p1962 = scmp.le.s32.totalorder 2, %s19
      // Predicated region
      $region65: #{space_time_model.1} parent=5 // pred_check
        %p1963 = pneg %p1962
      $region66: #{space_time_model.1} parent=5 // pred_check_branch
        %1965 = sbr.rel (%p1963) target = $region68
      $region67: #{space_time_model.1} parent=5 // pred_region
        %s1966 = ssub.s32 %s19, 2
        // Predicated region
        $region69: #{space_time_model.1} parent=67 // pred_check
          %p1967 = pneg %p268
        $region70: #{space_time_model.1} parent=67 // pred_check_branch
          %1969 = sbr.rel (%p1967) target = $region72
        $region71: #{space_time_model.1} parent=67 // pred_region
          %s1970 = sand.u32 %s253, 1
          %s1971 = scalar_lea.sflag [#allocation3], %s1970
          %s1972 = sand.u32 %s253, 1
          %s1973 = scalar_lea.vmem [#allocation2], %s1972
          %1974 = dma.done %s1971, 16
        $region72: #{space_time_model.1} parent=67 // pred_fallthru
          _
      $region68: #{space_time_model.1} parent=5 // pred_fallthru
        _
    $region6: #{space_time_model.1} parent=1 // loop_footer
      %s23 = sadd.s32 1, %s19
    $region7: #{space_time_model.1} parent=1 // loop_footer_branch
      %18 = sbr.rel target = $region3
    $region8: #{space_time_model.1} parent=1 // loop_exit
      _
    %1975 = vsyncpa [#allocation3], 1
    %s1976 = scalar_lea.sflag [#allocation3], 1
    %1977 = vsyncpa %s1976, 1

</llo_original>
